<compile_context>
chip_gen: v6e
topology: v6e:2x2x1
jax: 0.10.0
libtpu: 0.0.40
codegen_flags: <defaults>
</compile_context>

<pallas_src>
import math

import jax
import jax.numpy as jnp
import numpy as np
from jax import lax
from jax.experimental import pallas as pl
from jax.experimental.pallas import tpu as pltpu

# ----- model hyper-parameters (consistent with the module's forward) -----
INPUT_DIM = 16          # pose feature dim fed to the MLP
OUTPUT_DIM = 6          # Cobotta has 6 joints -> jnt_ranges is (6, 2)
H1, H2, H3 = 64, 128, 64
BATCH = 2

B_PAD = 8               # pad batch to the f32 sublane tile
LANES = 128             # every weight / bias / activation padded to 128 lanes

# Row offsets of each (in, 128) weight block inside the stacked weight slab.
# All offsets are multiples of 8 (sublane-aligned static slices).
W1_OFF = 0
W2_OFF = W1_OFF + INPUT_DIM        # 16
W3_OFF = W2_OFF + LANES            # 144   (w2 rows padded 64 -> 128)
W4_OFF = W3_OFF + LANES            # 272
W_ROWS = W4_OFF + LANES            # 400

# Rows of the bias/scale/shift slab (8, 128).
B1_ROW, B2_ROW, B3_ROW, B4_ROW, SCALE_ROW, SHIFT_ROW = 0, 1, 2, 3, 4, 5


def ikmlp_scale_kernel(x_ref, w_ref, bss_ref, out_ref):
    """x_ref: (8,16)  w_ref: (400,128)  bss_ref: (8,128)  out_ref: (8,128)."""
    prec = lax.Precision.HIGHEST

    w1 = w_ref[W1_OFF:W2_OFF, :]           # (16, 128)
    w2 = w_ref[W2_OFF:W3_OFF, :]           # (128, 128)
    w3 = w_ref[W3_OFF:W4_OFF, :]           # (128, 128)
    w4 = w_ref[W4_OFF:W_ROWS, :]           # (128, 128)

    b1 = bss_ref[B1_ROW:B1_ROW + 1, :]     # (1, 128)
    b2 = bss_ref[B2_ROW:B2_ROW + 1, :]
    b3 = bss_ref[B3_ROW:B3_ROW + 1, :]
    b4 = bss_ref[B4_ROW:B4_ROW + 1, :]
    scale = bss_ref[SCALE_ROW:SCALE_ROW + 1, :]
    shift = bss_ref[SHIFT_ROW:SHIFT_ROW + 1, :]

    h = jnp.dot(x_ref[...], w1, preferred_element_type=jnp.float32, precision=prec) + b1
    h = jnp.maximum(h, 0.0)
    h = jnp.dot(h, w2, preferred_element_type=jnp.float32, precision=prec) + b2
    h = jnp.maximum(h, 0.0)
    h = jnp.dot(h, w3, preferred_element_type=jnp.float32, precision=prec) + b3
    h = jnp.maximum(h, 0.0)
    h = jnp.dot(h, w4, preferred_element_type=jnp.float32, precision=prec) + b4
    # Tanh (EUP), then joint-range affine scaling fused into the epilogue.
    out_ref[...] = jnp.tanh(h) * scale + shift


def pack_params(params, jnt_ranges):
    """One-time host-side packing of all weights/biases into two VMEM slabs."""
    (w1, b1), (w2, b2), (w3, b3), (w4, b4) = params

    def pad_wt(w, rows, cols):
        # w is (out, in) PyTorch layout -> transpose to (in, out), zero-pad.
        wt = jnp.transpose(w).astype(jnp.float32)
        return jnp.pad(wt, ((0, rows - wt.shape[0]), (0, cols - wt.shape[1])))

    w_slab = jnp.concatenate([
        pad_wt(w1, INPUT_DIM, LANES),   # (16, 128)
        pad_wt(w2, LANES, LANES),       # (128,128) rows 64:128 are zero
        pad_wt(w3, LANES, LANES),       # (128,128)
        pad_wt(w4, LANES, LANES),       # (128,128) rows 64:128 are zero
    ], axis=0)                          # (400, 128)

    def pad_row(v):
        v = v.astype(jnp.float32).reshape(-1)
        return jnp.pad(v, (0, LANES - v.shape[0]))

    bss_slab = jnp.stack([
        pad_row(b1),
        pad_row(b2),
        pad_row(b3),
        pad_row(b4),
        pad_row(jnt_ranges[:, 1] - jnt_ranges[:, 0]),   # scale
        pad_row(jnt_ranges[:, 0]),                      # shift
        jnp.zeros((LANES,), jnp.float32),
        jnp.zeros((LANES,), jnp.float32),
    ], axis=0)                          # (8, 128)

    return w_slab, bss_slab


@jax.jit
def ikmlp_scale_forward_pallas(x, w_slab, bss_slab):
    B = x.shape[0]
    # Pad batch to a full sublane tile (padded rows are harmless, sliced off).
    x_p = jnp.zeros((B_PAD, INPUT_DIM), jnp.float32).at[:B].set(x.astype(jnp.float32))

    vmem = pl.BlockSpec(memory_space=pltpu.MemorySpace.VMEM)
    out_padded = pl.pallas_call(
        ikmlp_scale_kernel,
        out_shape=jax.ShapeDtypeStruct((B_PAD, LANES), jnp.float32),
        in_specs=[vmem, vmem, vmem],
        out_specs=vmem,
    )(x_p, w_slab, bss_slab)

    # Slice the real batch rows / joint columns back out.
    return out_padded[:B, :OUTPUT_DIM]


# --------------------------- reference + init ---------------------------------

def linear_init(key, in_f, out_f):
    """PyTorch nn.Linear default init: U(-1/sqrt(in), 1/sqrt(in)) for W and b."""
    k1, k2 = jax.random.split(key)
    bound = 1.0 / math.sqrt(in_f)
    w = jax.random.uniform(k1, (out_f, in_f), jnp.float32, -bound, bound)
    b = jax.random.uniform(k2, (out_f,), jnp.float32, -bound, bound)
    return w, b


def init_params(key):
    key, k1, k2, k3, k4 = jax.random.split(key, 5)
    params = (
        linear_init(k1, INPUT_DIM, H1),
        linear_init(k2, H1, H2),
        linear_init(k3, H2, H3),
        linear_init(k4, H3, OUTPUT_DIM),
    )
    # Cobotta joint ranges (rad): fixed constants standing in for robot.jnt_ranges.
    jnt_ranges = jnp.array([[-2.617, 2.617],
                            [-1.047, 1.745],
                            [0.314, 2.443],
                            [-2.967, 2.967],
                            [-1.658, 2.356],
                            [-2.967, 2.967]], dtype=jnp.float32)
    return params, jnt_ranges, key


def ikmlp_scale_forward_ref(x, params, jnt_ranges):
    """Pure-JAX reference mirroring the PyTorch module's forward."""
    (w1, b1), (w2, b2), (w3, b3), (w4, b4) = params
    h = jax.nn.relu(x @ w1.T + b1)
    h = jax.nn.relu(h @ w2.T + b2)
    h = jax.nn.relu(h @ w3.T + b3)
    out = jnp.tanh(h @ w4.T + b4)
    return out * (jnt_ranges[:, 1] - jnt_ranges[:, 0]) + jnt_ranges[:, 0]


if __name__ == "__main__":
    key = jax.random.PRNGKey(0)
    params, jnt_ranges, key = init_params(key)
    key, kx = jax.random.split(key)
    x = jax.random.normal(kx, (BATCH, INPUT_DIM), jnp.float32)

    # One-time packing (hoisted off the per-call path).
    w_slab, bss_slab = pack_params(params, jnt_ranges)
    w_slab = jax.block_until_ready(w_slab)
    bss_slab = jax.block_until_ready(bss_slab)

    out = ikmlp_scale_forward_pallas(x, w_slab, bss_slab)
    out = jax.block_until_ready(out)

    ref = ikmlp_scale_forward_ref(x, params, jnt_ranges)
    np.testing.assert_allclose(np.asarray(out), np.asarray(ref), rtol=1e-5, atol=1e-5)

    print("KERNEL_OK")
</pallas_src>

<mosaic_0001>
module attributes {stable_mosaic.version = 11 : i64} {
  func.func @ikmlp_scale_kernel(%arg0: memref<8x16xf32, #tpu.memory_space<vmem>>, %arg1: memref<400x128xf32, #tpu.memory_space<vmem>>, %arg2: memref<8x128xf32, #tpu.memory_space<vmem>>, %arg3: memref<8x128xf32, #tpu.memory_space<vmem>>) attributes {dimension_semantics = [], scalar_prefetch = 0 : i64, scratch_operands = 0 : i64, tpu.core_type = #tpu.core_type<tc>} {
    %c0 = arith.constant 0 : index
    %c0_0 = arith.constant 0 : index
    %0 = vector.load %arg1[%c0, %c0_0] : memref<400x128xf32, #tpu.memory_space<vmem>>, vector<16x128xf32>
    %c16 = arith.constant 16 : index
    %c0_1 = arith.constant 0 : index
    %1 = vector.load %arg1[%c16, %c0_1] : memref<400x128xf32, #tpu.memory_space<vmem>>, vector<128x128xf32>
    %c144 = arith.constant 144 : index
    %c0_2 = arith.constant 0 : index
    %2 = vector.load %arg1[%c144, %c0_2] : memref<400x128xf32, #tpu.memory_space<vmem>>, vector<128x128xf32>
    %c272 = arith.constant 272 : index
    %c0_3 = arith.constant 0 : index
    %3 = vector.load %arg1[%c272, %c0_3] : memref<400x128xf32, #tpu.memory_space<vmem>>, vector<128x128xf32>
    %c0_4 = arith.constant 0 : index
    %c0_5 = arith.constant 0 : index
    %4 = vector.load %arg2[%c0_4, %c0_5] : memref<8x128xf32, #tpu.memory_space<vmem>>, vector<1x128xf32>
    %c1 = arith.constant 1 : index
    %c0_6 = arith.constant 0 : index
    %5 = vector.load %arg2[%c1, %c0_6] : memref<8x128xf32, #tpu.memory_space<vmem>>, vector<1x128xf32>
    %c2 = arith.constant 2 : index
    %c0_7 = arith.constant 0 : index
    %6 = vector.load %arg2[%c2, %c0_7] : memref<8x128xf32, #tpu.memory_space<vmem>>, vector<1x128xf32>
    %c3 = arith.constant 3 : index
    %c0_8 = arith.constant 0 : index
    %7 = vector.load %arg2[%c3, %c0_8] : memref<8x128xf32, #tpu.memory_space<vmem>>, vector<1x128xf32>
    %c4 = arith.constant 4 : index
    %c0_9 = arith.constant 0 : index
    %8 = vector.load %arg2[%c4, %c0_9] : memref<8x128xf32, #tpu.memory_space<vmem>>, vector<1x128xf32>
    %c5 = arith.constant 5 : index
    %c0_10 = arith.constant 0 : index
    %9 = vector.load %arg2[%c5, %c0_10] : memref<8x128xf32, #tpu.memory_space<vmem>>, vector<1x128xf32>
    %c0_11 = arith.constant 0 : index
    %c0_12 = arith.constant 0 : index
    %10 = vector.load %arg0[%c0_11, %c0_12] : memref<8x16xf32, #tpu.memory_space<vmem>>, vector<8x16xf32>
    %cst = arith.constant dense<0.000000e+00> : vector<8x128xf32>
    %11 = tpu.matmul %10, %0, %cst {dimension_numbers = #tpu.dot_dimension_numbers<[1], [0], [0], [1], [0, 0, 1, 1], [], []>, precision = #tpu.contract_precision<fp32>} : vector<8x16xf32>, vector<16x128xf32>, vector<8x128xf32> -> vector<8x128xf32>
    %12 = vector.broadcast %4 : vector<1x128xf32> to vector<8x128xf32>
    %13 = arith.addf %11, %12 : vector<8x128xf32>
    %cst_13 = arith.constant 0.000000e+00 : f32
    %14 = vector.broadcast %cst_13 : f32 to vector<8x128xf32>
    %15 = arith.maximumf %13, %14 : vector<8x128xf32>
    %cst_14 = arith.constant dense<0.000000e+00> : vector<8x128xf32>
    %16 = tpu.matmul %15, %1, %cst_14 {dimension_numbers = #tpu.dot_dimension_numbers<[1], [0], [0], [1], [0, 0, 1, 1], [], []>, precision = #tpu.contract_precision<fp32>} : vector<8x128xf32>, vector<128x128xf32>, vector<8x128xf32> -> vector<8x128xf32>
    %17 = vector.broadcast %5 : vector<1x128xf32> to vector<8x128xf32>
    %18 = arith.addf %16, %17 : vector<8x128xf32>
    %cst_15 = arith.constant 0.000000e+00 : f32
    %19 = vector.broadcast %cst_15 : f32 to vector<8x128xf32>
    %20 = arith.maximumf %18, %19 : vector<8x128xf32>
    %cst_16 = arith.constant dense<0.000000e+00> : vector<8x128xf32>
    %21 = tpu.matmul %20, %2, %cst_16 {dimension_numbers = #tpu.dot_dimension_numbers<[1], [0], [0], [1], [0, 0, 1, 1], [], []>, precision = #tpu.contract_precision<fp32>} : vector<8x128xf32>, vector<128x128xf32>, vector<8x128xf32> -> vector<8x128xf32>
    %22 = vector.broadcast %6 : vector<1x128xf32> to vector<8x128xf32>
    %23 = arith.addf %21, %22 : vector<8x128xf32>
    %cst_17 = arith.constant 0.000000e+00 : f32
    %24 = vector.broadcast %cst_17 : f32 to vector<8x128xf32>
    %25 = arith.maximumf %23, %24 : vector<8x128xf32>
    %cst_18 = arith.constant dense<0.000000e+00> : vector<8x128xf32>
    %26 = tpu.matmul %25, %3, %cst_18 {dimension_numbers = #tpu.dot_dimension_numbers<[1], [0], [0], [1], [0, 0, 1, 1], [], []>, precision = #tpu.contract_precision<fp32>} : vector<8x128xf32>, vector<128x128xf32>, vector<8x128xf32> -> vector<8x128xf32>
    %27 = vector.broadcast %7 : vector<1x128xf32> to vector<8x128xf32>
    %28 = arith.addf %26, %27 : vector<8x128xf32>
    %29 = math.tanh %28 : vector<8x128xf32>
    %30 = vector.broadcast %8 : vector<1x128xf32> to vector<8x128xf32>
    %31 = arith.mulf %29, %30 : vector<8x128xf32>
    %32 = vector.broadcast %9 : vector<1x128xf32> to vector<8x128xf32>
    %33 = arith.addf %31, %32 : vector<8x128xf32>
    %c0_19 = arith.constant 0 : index
    %c0_20 = arith.constant 0 : index
    %34 = vector.load %arg3[%c0_19, %c0_20] : memref<8x128xf32, #tpu.memory_space<vmem>>, vector<8x128xf32>
    tpu.vector_store %arg3[%c0_19, %c0_20], %33 {strides = array<i32>} : memref<8x128xf32, #tpu.memory_space<vmem>>, vector<8x128xf32>,
    return
  }
}

</mosaic_0001>

<llo_original>
// kernel: ikmlp_scale_forward_pallas.1
$region0: #{ikmlp_scale_forward_pallas.1}
  #allocation0 [shape = 'u32[]', space=smem, size = 0x4, offset = 0x4, fixed_abs, tag = 'smem constant byte address 0x4 - core index']
  #allocation1 [shape = 'u32[144,128]{1,0:T(1,128)}', space=vmem, size = 0x12000, scoped, tag = 'internal scratch']
  %s0 = inlined_call_operand.vmem [shape: f32[8,16], index: 0, kind: input, shape index: {}]
  %s1 = inlined_call_operand.hbm [shape: f32[400,128], index: 1, kind: input, shape index: {}]
  %s2 = inlined_call_operand.vmem [shape: f32[8,128], index: 2, kind: input, shape index: {}]
  %s3 = inlined_call_operand.vmem [shape: f32[8,128], index: 3, kind: output, shape index: {}]
  %s4 = sld [smem:[#allocation0]]
  $region26: #{ikmlp_scale_forward_pallas.1} parent=0
    _
  %s6 = ssub.s32 1, %s4
  %s7 = scalar_select 0, %s6, %s4
  $region1: #{ikmlp_scale_forward_pallas.1} parent=0
    #allocation2 [shape = 'u8[204800]{0}', space=vmem, size = 0x32000, scoped, tag = 'input window, operand 1, single buffered']
    #allocation3 [shape = 's32[1]{0}', space=sflag, size = 0x4, scoped, tag = 'scoped memory for ikmlp_scale_forward_pallas.1']
    %8 = vsyncpa [#allocation3], 0
    // Predicated region
    $region2: #{ikmlp_scale_forward_pallas.1} parent=1 // pred_check
      _
    $region3: #{ikmlp_scale_forward_pallas.1} parent=1 // pred_check_branch
      %10 = sbr.rel (0) target = $region5
    $region4: #{ikmlp_scale_forward_pallas.1} parent=1 // pred_region
      _
    $region5: #{ikmlp_scale_forward_pallas.1} parent=1 // pred_fallthru
      _
    // Predicated region
    $region6: #{ikmlp_scale_forward_pallas.1} parent=1 // pred_check
      _
    $region7: #{ikmlp_scale_forward_pallas.1} parent=1 // pred_check_branch
      %12 = sbr.rel (0) target = $region9
    $region8: #{ikmlp_scale_forward_pallas.1} parent=1 // pred_region
      %s14 = ssub.s32 6400, 6400
      %15 = vsyncadd [#allocation3], %s14
      %s16 = sshll.u32 [#allocation2], 4
      %s17 = int_to_ptr.vmem [resolvable:$true] %s16
      %22 = dma.hbm_to_vmem [thread:$0]  %s1, 6400, %s17, [#allocation3], 128, 128, 8
    $region9: #{ikmlp_scale_forward_pallas.1} parent=1 // pred_fallthru
      _
    // Predicated region
    $region10: #{ikmlp_scale_forward_pallas.1} parent=1 // pred_check
      _
    $region11: #{ikmlp_scale_forward_pallas.1} parent=1 // pred_check_branch
      %24 = sbr.rel (0) target = $region13
    $region12: #{ikmlp_scale_forward_pallas.1} parent=1 // pred_region
      _
    $region13: #{ikmlp_scale_forward_pallas.1} parent=1 // pred_fallthru
      _
    // Predicated region
    $region14: #{ikmlp_scale_forward_pallas.1} parent=1 // pred_check
      _
    $region15: #{ikmlp_scale_forward_pallas.1} parent=1 // pred_check_branch
      %26 = sbr.rel (0) target = $region17
    $region16: #{ikmlp_scale_forward_pallas.1} parent=1 // pred_region
      %27 = dma.done [#allocation3], 6400
    $region17: #{ikmlp_scale_forward_pallas.1} parent=1 // pred_fallthru
      _
    %v28 = vld [vmem:[#allocation2] sm:$0xff]
    %v29 = vld [vmem:[#allocation2 + $0x8] sm:$0xff]
    %v30 = vld [vmem:[#allocation2 + $0x10] sm:$0xff]
    %v31 = vld [vmem:[#allocation2 + $0x18] sm:$0xff]
    %v32 = vld [vmem:[#allocation2 + $0x20] sm:$0xff]
    %v33 = vld [vmem:[#allocation2 + $0x28] sm:$0xff]
    %v34 = vld [vmem:[#allocation2 + $0x30] sm:$0xff]
    %v35 = vld [vmem:[#allocation2 + $0x38] sm:$0xff]
    %v36 = vld [vmem:[#allocation2 + $0x40] sm:$0xff]
    %v37 = vld [vmem:[#allocation2 + $0x48] sm:$0xff]
    %v38 = vld [vmem:[#allocation2 + $0x50] sm:$0xff]
    %v39 = vld [vmem:[#allocation2 + $0x58] sm:$0xff]
    %v40 = vld [vmem:[#allocation2 + $0x60] sm:$0xff]
    %v41 = vld [vmem:[#allocation2 + $0x68] sm:$0xff]
    %v42 = vld [vmem:[#allocation2 + $0x70] sm:$0xff]
    %v43 = vld [vmem:[#allocation2 + $0x78] sm:$0xff]
    %v44 = vld [vmem:[#allocation2 + $0x80] sm:$0xff]
    %v45 = vld [vmem:[#allocation2 + $0x88] sm:$0xff]
    %v46 = vld [vmem:[#allocation2 + $0x90] sm:$0xff]
    %v47 = vld [vmem:[#allocation2 + $0x98] sm:$0xff]
    %v48 = vld [vmem:[#allocation2 + $0xa0] sm:$0xff]
    %v49 = vld [vmem:[#allocation2 + $0xa8] sm:$0xff]
    %v50 = vld [vmem:[#allocation2 + $0xb0] sm:$0xff]
    %v51 = vld [vmem:[#allocation2 + $0xb8] sm:$0xff]
    %v52 = vld [vmem:[#allocation2 + $0xc0] sm:$0xff]
    %v53 = vld [vmem:[#allocation2 + $0xc8] sm:$0xff]
    %v54 = vld [vmem:[#allocation2 + $0xd0] sm:$0xff]
    %v55 = vld [vmem:[#allocation2 + $0xd8] sm:$0xff]
    %v56 = vld [vmem:[#allocation2 + $0xe0] sm:$0xff]
    %v57 = vld [vmem:[#allocation2 + $0xe8] sm:$0xff]
    %v58 = vld [vmem:[#allocation2 + $0xf0] sm:$0xff]
    %v59 = vld [vmem:[#allocation2 + $0xf8] sm:$0xff]
    %v60 = vld [vmem:[#allocation2 + $0x100] sm:$0xff]
    %v61 = vld [vmem:[#allocation2 + $0x108] sm:$0xff]
    %v62 = vld [vmem:[#allocation2 + $0x110] sm:$0xff]
    %v63 = vld [vmem:[#allocation2 + $0x118] sm:$0xff]
    %v64 = vld [vmem:[#allocation2 + $0x120] sm:$0xff]
    %v65 = vld [vmem:[#allocation2 + $0x128] sm:$0xff]
    %v66 = vld [vmem:[#allocation2 + $0x130] sm:$0xff]
    %v67 = vld [vmem:[#allocation2 + $0x138] sm:$0xff]
    %v68 = vld [vmem:[#allocation2 + $0x140] sm:$0xff]
    %v69 = vld [vmem:[#allocation2 + $0x148] sm:$0xff]
    %v70 = vld [vmem:[#allocation2 + $0x150] sm:$0xff]
    %v71 = vld [vmem:[#allocation2 + $0x158] sm:$0xff]
    %v72 = vld [vmem:[#allocation2 + $0x160] sm:$0xff]
    %v73 = vld [vmem:[#allocation2 + $0x168] sm:$0xff]
    %v74 = vld [vmem:[#allocation2 + $0x170] sm:$0xff]
    %v75 = vld [vmem:[#allocation2 + $0x178] sm:$0xff]
    %v76 = vld [vmem:[#allocation2 + $0x180] sm:$0xff]
    %v77 = vld [vmem:[#allocation2 + $0x188] sm:$0xff]
    %v78 = vld [vmem:[%s2] sm:$0x1]
    %v79 = vld [vmem:[%s2 + $0x1] sm:$0x1]
    %v80 = vld [vmem:[%s2 + $0x2] sm:$0x1]
    %v81 = vld [vmem:[%s2 + $0x3] sm:$0x1]
    %v82 = vld [vmem:[%s2 + $0x4] sm:$0x1]
    %v83 = vld [vmem:[%s2 + $0x5] sm:$0x1]
    %v84 = vld [vmem:[%s0] sm:$0xff]
    %v85 = vlaneseq
    %v86 = vshrl.u32 %v85, 7
    %v87 = vsub.s32 0, %v86
    %v88 = vrot.slane %v78, %v87
    %vm89 = vcmask 130048
    %v91 = vsel %vm89, %v84, 0
    %93 = vmatprep.subr.mxu0 0.0
    %94 = vmatpush1.msra.mxu0 0.0
    %95 = vmatprep.subr.mxu0 0.0
    %96 = vmatpush1.msra.mxu0 0.0
    %97 = vmatprep.subr.mxu0 0.0
    %98 = vmatpush1.msra.mxu0 0.0
    %99 = vmatprep.subr.mxu0 0.0
    %100 = vmatpush1.msra.mxu0 0.0
    %101 = vmatprep.subr.mxu0 0.0
    %102 = vmatpush1.msra.mxu0 0.0
    %103 = vmatprep.subr.mxu0 0.0
    %104 = vmatpush1.msra.mxu0 0.0
    %105 = vmatprep.subr.mxu0 0.0
    %106 = vmatpush1.msra.mxu0 0.0
    %107 = vmatprep.subr.mxu0 0.0
    %108 = vmatpush1.msra.mxu0 0.0
    %109 = vmatprep.subr.mxu0 0.0
    %110 = vmatpush1.msra.mxu0 0.0
    %111 = vmatprep.subr.mxu0 0.0
    %112 = vmatpush1.msra.mxu0 0.0
    %113 = vmatprep.subr.mxu0 0.0
    %114 = vmatpush1.msra.mxu0 0.0
    %115 = vmatprep.subr.mxu0 0.0
    %116 = vmatpush1.msra.mxu0 0.0
    %117 = vmatprep.subr.mxu0 0.0
    %118 = vmatpush1.msra.mxu0 0.0
    %119 = vmatprep.subr.mxu0 0.0
    %120 = vmatpush1.msra.mxu0 0.0
    %121 = vmatprep.subr.mxu0 0.0
    %v122 = vand.u32 %v29, 4294901760
    %123 = vmatpush1.msra.mxu0 %v122
    %124 = vmatprep.subr.mxu0 0.0
    %v125 = vand.u32 %v28, 4294901760
    %126 = vmatpush1.msra.mxu0 %v125
    %127 = vmatprep.subr.mxu0 0.0
    %128 = vmatpush2.msra.mxu0 0.0
    %129 = vmatprep.subr.mxu0 0.0
    %130 = vmatpush2.msra.mxu0 0.0
    %131 = vmatprep.subr.mxu0 0.0
    %132 = vmatpush2.msra.mxu0 0.0
    %133 = vmatprep.subr.mxu0 0.0
    %134 = vmatpush2.msra.mxu0 0.0
    %135 = vmatprep.subr.mxu0 0.0
    %136 = vmatpush2.msra.mxu0 0.0
    %137 = vmatprep.subr.mxu0 0.0
    %138 = vmatpush2.msra.mxu0 0.0
    %139 = vmatprep.subr.mxu0 0.0
    %140 = vmatpush2.msra.mxu0 0.0
    %141 = vmatprep.subr.mxu0 0.0
    %142 = vmatpush2.msra.mxu0 0.0
    %143 = vmatprep.subr.mxu0 0.0
    %144 = vmatpush2.msra.mxu0 0.0
    %145 = vmatprep.subr.mxu0 0.0
    %146 = vmatpush2.msra.mxu0 0.0
    %147 = vmatprep.subr.mxu0 0.0
    %148 = vmatpush2.msra.mxu0 0.0
    %149 = vmatprep.subr.mxu0 0.0
    %150 = vmatpush2.msra.mxu0 0.0
    %151 = vmatprep.subr.mxu0 0.0
    %152 = vmatpush2.msra.mxu0 0.0
    %153 = vmatprep.subr.mxu0 0.0
    %154 = vmatpush2.msra.mxu0 0.0
    %155 = vmatprep.subr.mxu0 0.0
    %156 = vmatpush2.msra.mxu0 0.0
    %157 = vmatprep.subr.mxu0 0.0
    %158 = vmatpush2.msra.mxu0 0.0
    %159 = vmatprep.mubr.f32.mxu0 0.0
    %v160 = vand.u32 %v91, 4294901760
    %v161 = vsub.f32 %v91, %v160
    %v162 = vand.u32 %v161, 4294901760
    %v163 = vsub.f32 %v161, %v162
    %v164 = vand.u32 %v163, 4294901760
    %165 = vmatmul.mubr.f32.gmra.mxu0 %v164
    %v166 = vpop.f32.mrf.mxu0
    %v167 = vadd.f32 %v88, %v166
    %v168 = vpop.f32.mrf.mxu0
    %169 = vdwg.mxu0
    %170 = vmatprep.subr.mxu0 0.0
    %171 = vmatpush1.msra.mxu0 0.0
    %172 = vmatprep.subr.mxu0 0.0
    %173 = vmatpush1.msra.mxu0 0.0
    %174 = vmatprep.subr.mxu0 0.0
    %175 = vmatpush1.msra.mxu0 0.0
    %176 = vmatprep.subr.mxu0 0.0
    %177 = vmatpush1.msra.mxu0 0.0
    %178 = vmatprep.subr.mxu0 0.0
    %179 = vmatpush1.msra.mxu0 0.0
    %180 = vmatprep.subr.mxu0 0.0
    %181 = vmatpush1.msra.mxu0 0.0
    %182 = vmatprep.subr.mxu0 0.0
    %183 = vmatpush1.msra.mxu0 0.0
    %184 = vmatprep.subr.mxu0 0.0
    %185 = vmatpush1.msra.mxu0 0.0
    %186 = vmatprep.subr.mxu0 0.0
    %187 = vmatpush1.msra.mxu0 0.0
    %188 = vmatprep.subr.mxu0 0.0
    %189 = vmatpush1.msra.mxu0 0.0
    %190 = vmatprep.subr.mxu0 0.0
    %191 = vmatpush1.msra.mxu0 0.0
    %192 = vmatprep.subr.mxu0 0.0
    %193 = vmatpush1.msra.mxu0 0.0
    %194 = vmatprep.subr.mxu0 0.0
    %195 = vmatpush1.msra.mxu0 0.0
    %196 = vmatprep.subr.mxu0 0.0
    %197 = vmatpush1.msra.mxu0 0.0
    %198 = vmatprep.subr.mxu0 0.0
    %v199 = vand.u32 %v29, 4294901760
    %v200 = vsub.f32 %v29, %v199
    %v201 = vand.u32 %v200, 4294901760
    %v202 = vsub.f32 %v200, %v201
    %v203 = vand.u32 %v202, 4294901760
    %204 = vmatpush1.msra.mxu0 %v203
    %205 = vmatprep.subr.mxu0 0.0
    %v206 = vand.u32 %v28, 4294901760
    %v207 = vsub.f32 %v28, %v206
    %v208 = vand.u32 %v207, 4294901760
    %v209 = vsub.f32 %v207, %v208
    %v210 = vand.u32 %v209, 4294901760
    %211 = vmatpush1.msra.mxu0 %v210
    %212 = vmatprep.subr.mxu0 0.0
    %213 = vmatpush2.msra.mxu0 0.0
    %214 = vmatprep.subr.mxu0 0.0
    %215 = vmatpush2.msra.mxu0 0.0
    %216 = vmatprep.subr.mxu0 0.0
    %217 = vmatpush2.msra.mxu0 0.0
    %218 = vmatprep.subr.mxu0 0.0
    %219 = vmatpush2.msra.mxu0 0.0
    %220 = vmatprep.subr.mxu0 0.0
    %221 = vmatpush2.msra.mxu0 0.0
    %222 = vmatprep.subr.mxu0 0.0
    %223 = vmatpush2.msra.mxu0 0.0
    %224 = vmatprep.subr.mxu0 0.0
    %225 = vmatpush2.msra.mxu0 0.0
    %226 = vmatprep.subr.mxu0 0.0
    %227 = vmatpush2.msra.mxu0 0.0
    %228 = vmatprep.subr.mxu0 0.0
    %229 = vmatpush2.msra.mxu0 0.0
    %230 = vmatprep.subr.mxu0 0.0
    %231 = vmatpush2.msra.mxu0 0.0
    %232 = vmatprep.subr.mxu0 0.0
    %233 = vmatpush2.msra.mxu0 0.0
    %234 = vmatprep.subr.mxu0 0.0
    %235 = vmatpush2.msra.mxu0 0.0
    %236 = vmatprep.subr.mxu0 0.0
    %237 = vmatpush2.msra.mxu0 0.0
    %238 = vmatprep.subr.mxu0 0.0
    %239 = vmatpush2.msra.mxu0 0.0
    %240 = vmatprep.subr.mxu0 0.0
    %241 = vmatpush2.msra.mxu0 0.0
    %242 = vmatprep.subr.mxu0 0.0
    %243 = vmatpush2.msra.mxu0 0.0
    %244 = vmatprep.mubr.f32.mxu0 0.0
    %v245 = vand.u32 %v91, 4294901760
    %246 = vmatmul.mubr.f32.gmra.mxu0 %v245
    %v247 = vpop.f32.mrf.mxu0
    %v248 = vadd.f32 %v167, %v247
    %v249 = vpop.f32.mrf.mxu0
    %250 = vdwg.mxu0
    %251 = vmatprep.subr.mxu0 0.0
    %252 = vmatpush1.msra.mxu0 0.0
    %253 = vmatprep.subr.mxu0 0.0
    %254 = vmatpush1.msra.mxu0 0.0
    %255 = vmatprep.subr.mxu0 0.0
    %256 = vmatpush1.msra.mxu0 0.0
    %257 = vmatprep.subr.mxu0 0.0
    %258 = vmatpush1.msra.mxu0 0.0
    %259 = vmatprep.subr.mxu0 0.0
    %260 = vmatpush1.msra.mxu0 0.0
    %261 = vmatprep.subr.mxu0 0.0
    %262 = vmatpush1.msra.mxu0 0.0
    %263 = vmatprep.subr.mxu0 0.0
    %264 = vmatpush1.msra.mxu0 0.0
    %265 = vmatprep.subr.mxu0 0.0
    %266 = vmatpush1.msra.mxu0 0.0
    %267 = vmatprep.subr.mxu0 0.0
    %268 = vmatpush1.msra.mxu0 0.0
    %269 = vmatprep.subr.mxu0 0.0
    %270 = vmatpush1.msra.mxu0 0.0
    %271 = vmatprep.subr.mxu0 0.0
    %272 = vmatpush1.msra.mxu0 0.0
    %273 = vmatprep.subr.mxu0 0.0
    %274 = vmatpush1.msra.mxu0 0.0
    %275 = vmatprep.subr.mxu0 0.0
    %276 = vmatpush1.msra.mxu0 0.0
    %277 = vmatprep.subr.mxu0 0.0
    %278 = vmatpush1.msra.mxu0 0.0
    %279 = vmatprep.subr.mxu0 0.0
    %v280 = vand.u32 %v29, 4294901760
    %v281 = vsub.f32 %v29, %v280
    %282 = vmatpush1.msra.mxu0 %v281
    %283 = vmatprep.subr.mxu0 0.0
    %v284 = vand.u32 %v28, 4294901760
    %v285 = vsub.f32 %v28, %v284
    %286 = vmatpush1.msra.mxu0 %v285
    %287 = vmatprep.subr.mxu0 0.0
    %288 = vmatpush2.msra.mxu0 0.0
    %289 = vmatprep.subr.mxu0 0.0
    %290 = vmatpush2.msra.mxu0 0.0
    %291 = vmatprep.subr.mxu0 0.0
    %292 = vmatpush2.msra.mxu0 0.0
    %293 = vmatprep.subr.mxu0 0.0
    %294 = vmatpush2.msra.mxu0 0.0
    %295 = vmatprep.subr.mxu0 0.0
    %296 = vmatpush2.msra.mxu0 0.0
    %297 = vmatprep.subr.mxu0 0.0
    %298 = vmatpush2.msra.mxu0 0.0
    %299 = vmatprep.subr.mxu0 0.0
    %300 = vmatpush2.msra.mxu0 0.0
    %301 = vmatprep.subr.mxu0 0.0
    %302 = vmatpush2.msra.mxu0 0.0
    %303 = vmatprep.subr.mxu0 0.0
    %304 = vmatpush2.msra.mxu0 0.0
    %305 = vmatprep.subr.mxu0 0.0
    %306 = vmatpush2.msra.mxu0 0.0
    %307 = vmatprep.subr.mxu0 0.0
    %308 = vmatpush2.msra.mxu0 0.0
    %309 = vmatprep.subr.mxu0 0.0
    %310 = vmatpush2.msra.mxu0 0.0
    %311 = vmatprep.subr.mxu0 0.0
    %312 = vmatpush2.msra.mxu0 0.0
    %313 = vmatprep.subr.mxu0 0.0
    %314 = vmatpush2.msra.mxu0 0.0
    %315 = vmatprep.subr.mxu0 0.0
    %316 = vmatpush2.msra.mxu0 0.0
    %317 = vmatprep.subr.mxu0 0.0
    %318 = vmatpush2.msra.mxu0 0.0
    %319 = vmatprep.mubr.f32.mxu0 0.0
    %v320 = vand.u32 %v91, 4294901760
    %v321 = vsub.f32 %v91, %v320
    %322 = vmatmul.mubr.f32.gmra.mxu0 %v321
    %v323 = vpop.f32.mrf.mxu0
    %v324 = vadd.f32 %v248, %v323
    %v325 = vpop.f32.mrf.mxu0
    %326 = vdwg.mxu0
    %327 = vmatprep.subr.mxu0 0.0
    %328 = vmatpush1.msra.mxu0 0.0
    %329 = vmatprep.subr.mxu0 0.0
    %330 = vmatpush1.msra.mxu0 0.0
    %331 = vmatprep.subr.mxu0 0.0
    %332 = vmatpush1.msra.mxu0 0.0
    %333 = vmatprep.subr.mxu0 0.0
    %334 = vmatpush1.msra.mxu0 0.0
    %335 = vmatprep.subr.mxu0 0.0
    %336 = vmatpush1.msra.mxu0 0.0
    %337 = vmatprep.subr.mxu0 0.0
    %338 = vmatpush1.msra.mxu0 0.0
    %339 = vmatprep.subr.mxu0 0.0
    %340 = vmatpush1.msra.mxu0 0.0
    %341 = vmatprep.subr.mxu0 0.0
    %342 = vmatpush1.msra.mxu0 0.0
    %343 = vmatprep.subr.mxu0 0.0
    %344 = vmatpush1.msra.mxu0 0.0
    %345 = vmatprep.subr.mxu0 0.0
    %346 = vmatpush1.msra.mxu0 0.0
    %347 = vmatprep.subr.mxu0 0.0
    %348 = vmatpush1.msra.mxu0 0.0
    %349 = vmatprep.subr.mxu0 0.0
    %350 = vmatpush1.msra.mxu0 0.0
    %351 = vmatprep.subr.mxu0 0.0
    %352 = vmatpush1.msra.mxu0 0.0
    %353 = vmatprep.subr.mxu0 0.0
    %354 = vmatpush1.msra.mxu0 0.0
    %355 = vmatprep.subr.mxu0 0.0
    %v356 = vand.u32 %v29, 4294901760
    %357 = vmatpush1.msra.mxu0 %v356
    %358 = vmatprep.subr.mxu0 0.0
    %v359 = vand.u32 %v28, 4294901760
    %360 = vmatpush1.msra.mxu0 %v359
    %361 = vmatprep.subr.mxu0 0.0
    %362 = vmatpush2.msra.mxu0 0.0
    %363 = vmatprep.subr.mxu0 0.0
    %364 = vmatpush2.msra.mxu0 0.0
    %365 = vmatprep.subr.mxu0 0.0
    %366 = vmatpush2.msra.mxu0 0.0
    %367 = vmatprep.subr.mxu0 0.0
    %368 = vmatpush2.msra.mxu0 0.0
    %369 = vmatprep.subr.mxu0 0.0
    %370 = vmatpush2.msra.mxu0 0.0
    %371 = vmatprep.subr.mxu0 0.0
    %372 = vmatpush2.msra.mxu0 0.0
    %373 = vmatprep.subr.mxu0 0.0
    %374 = vmatpush2.msra.mxu0 0.0
    %375 = vmatprep.subr.mxu0 0.0
    %376 = vmatpush2.msra.mxu0 0.0
    %377 = vmatprep.subr.mxu0 0.0
    %378 = vmatpush2.msra.mxu0 0.0
    %379 = vmatprep.subr.mxu0 0.0
    %380 = vmatpush2.msra.mxu0 0.0
    %381 = vmatprep.subr.mxu0 0.0
    %382 = vmatpush2.msra.mxu0 0.0
    %383 = vmatprep.subr.mxu0 0.0
    %384 = vmatpush2.msra.mxu0 0.0
    %385 = vmatprep.subr.mxu0 0.0
    %386 = vmatpush2.msra.mxu0 0.0
    %387 = vmatprep.subr.mxu0 0.0
    %388 = vmatpush2.msra.mxu0 0.0
    %389 = vmatprep.subr.mxu0 0.0
    %390 = vmatpush2.msra.mxu0 0.0
    %391 = vmatprep.subr.mxu0 0.0
    %392 = vmatpush2.msra.mxu0 0.0
    %393 = vmatprep.mubr.f32.mxu0 0.0
    %v394 = vand.u32 %v91, 4294901760
    %v395 = vsub.f32 %v91, %v394
    %v396 = vand.u32 %v395, 4294901760
    %397 = vmatmul.mubr.f32.gmra.mxu0 %v396
    %v398 = vpop.f32.mrf.mxu0
    %v399 = vadd.f32 %v324, %v398
    %v400 = vpop.f32.mrf.mxu0
    %401 = vdwg.mxu0
    %402 = vmatprep.subr.mxu0 0.0
    %403 = vmatpush1.msra.mxu0 0.0
    %404 = vmatprep.subr.mxu0 0.0
    %405 = vmatpush1.msra.mxu0 0.0
    %406 = vmatprep.subr.mxu0 0.0
    %407 = vmatpush1.msra.mxu0 0.0
    %408 = vmatprep.subr.mxu0 0.0
    %409 = vmatpush1.msra.mxu0 0.0
    %410 = vmatprep.subr.mxu0 0.0
    %411 = vmatpush1.msra.mxu0 0.0
    %412 = vmatprep.subr.mxu0 0.0
    %413 = vmatpush1.msra.mxu0 0.0
    %414 = vmatprep.subr.mxu0 0.0
    %415 = vmatpush1.msra.mxu0 0.0
    %416 = vmatprep.subr.mxu0 0.0
    %417 = vmatpush1.msra.mxu0 0.0
    %418 = vmatprep.subr.mxu0 0.0
    %419 = vmatpush1.msra.mxu0 0.0
    %420 = vmatprep.subr.mxu0 0.0
    %421 = vmatpush1.msra.mxu0 0.0
    %422 = vmatprep.subr.mxu0 0.0
    %423 = vmatpush1.msra.mxu0 0.0
    %424 = vmatprep.subr.mxu0 0.0
    %425 = vmatpush1.msra.mxu0 0.0
    %426 = vmatprep.subr.mxu0 0.0
    %427 = vmatpush1.msra.mxu0 0.0
    %428 = vmatprep.subr.mxu0 0.0
    %429 = vmatpush1.msra.mxu0 0.0
    %430 = vmatprep.subr.mxu0 0.0
    %v431 = vand.u32 %v29, 4294901760
    %v432 = vsub.f32 %v29, %v431
    %v433 = vand.u32 %v432, 4294901760
    %434 = vmatpush1.msra.mxu0 %v433
    %435 = vmatprep.subr.mxu0 0.0
    %v436 = vand.u32 %v28, 4294901760
    %v437 = vsub.f32 %v28, %v436
    %v438 = vand.u32 %v437, 4294901760
    %439 = vmatpush1.msra.mxu0 %v438
    %440 = vmatprep.subr.mxu0 0.0
    %441 = vmatpush2.msra.mxu0 0.0
    %442 = vmatprep.subr.mxu0 0.0
    %443 = vmatpush2.msra.mxu0 0.0
    %444 = vmatprep.subr.mxu0 0.0
    %445 = vmatpush2.msra.mxu0 0.0
    %446 = vmatprep.subr.mxu0 0.0
    %447 = vmatpush2.msra.mxu0 0.0
    %448 = vmatprep.subr.mxu0 0.0
    %449 = vmatpush2.msra.mxu0 0.0
    %450 = vmatprep.subr.mxu0 0.0
    %451 = vmatpush2.msra.mxu0 0.0
    %452 = vmatprep.subr.mxu0 0.0
    %453 = vmatpush2.msra.mxu0 0.0
    %454 = vmatprep.subr.mxu0 0.0
    %455 = vmatpush2.msra.mxu0 0.0
    %456 = vmatprep.subr.mxu0 0.0
    %457 = vmatpush2.msra.mxu0 0.0
    %458 = vmatprep.subr.mxu0 0.0
    %459 = vmatpush2.msra.mxu0 0.0
    %460 = vmatprep.subr.mxu0 0.0
    %461 = vmatpush2.msra.mxu0 0.0
    %462 = vmatprep.subr.mxu0 0.0
    %463 = vmatpush2.msra.mxu0 0.0
    %464 = vmatprep.subr.mxu0 0.0
    %465 = vmatpush2.msra.mxu0 0.0
    %466 = vmatprep.subr.mxu0 0.0
    %467 = vmatpush2.msra.mxu0 0.0
    %468 = vmatprep.subr.mxu0 0.0
    %469 = vmatpush2.msra.mxu0 0.0
    %470 = vmatprep.subr.mxu0 0.0
    %471 = vmatpush2.msra.mxu0 0.0
    %472 = vmatprep.mubr.f32.mxu0 0.0
    %v473 = vand.u32 %v91, 4294901760
    %474 = vmatmul.mubr.f32.gmra.mxu0 %v473
    %v475 = vpop.f32.mrf.mxu0
    %v476 = vadd.f32 %v399, %v475
    %v477 = vpop.f32.mrf.mxu0
    %478 = vdwg.mxu0
    %479 = vmatprep.subr.mxu0 0.0
    %480 = vmatpush1.msra.mxu0 0.0
    %481 = vmatprep.subr.mxu0 0.0
    %482 = vmatpush1.msra.mxu0 0.0
    %483 = vmatprep.subr.mxu0 0.0
    %484 = vmatpush1.msra.mxu0 0.0
    %485 = vmatprep.subr.mxu0 0.0
    %486 = vmatpush1.msra.mxu0 0.0
    %487 = vmatprep.subr.mxu0 0.0
    %488 = vmatpush1.msra.mxu0 0.0
    %489 = vmatprep.subr.mxu0 0.0
    %490 = vmatpush1.msra.mxu0 0.0
    %491 = vmatprep.subr.mxu0 0.0
    %492 = vmatpush1.msra.mxu0 0.0
    %493 = vmatprep.subr.mxu0 0.0
    %494 = vmatpush1.msra.mxu0 0.0
    %495 = vmatprep.subr.mxu0 0.0
    %496 = vmatpush1.msra.mxu0 0.0
    %497 = vmatprep.subr.mxu0 0.0
    %498 = vmatpush1.msra.mxu0 0.0
    %499 = vmatprep.subr.mxu0 0.0
    %500 = vmatpush1.msra.mxu0 0.0
    %501 = vmatprep.subr.mxu0 0.0
    %502 = vmatpush1.msra.mxu0 0.0
    %503 = vmatprep.subr.mxu0 0.0
    %504 = vmatpush1.msra.mxu0 0.0
    %505 = vmatprep.subr.mxu0 0.0
    %506 = vmatpush1.msra.mxu0 0.0
    %507 = vmatprep.subr.mxu0 0.0
    %v508 = vand.u32 %v29, 4294901760
    %509 = vmatpush1.msra.mxu0 %v508
    %510 = vmatprep.subr.mxu0 0.0
    %v511 = vand.u32 %v28, 4294901760
    %512 = vmatpush1.msra.mxu0 %v511
    %513 = vmatprep.subr.mxu0 0.0
    %514 = vmatpush2.msra.mxu0 0.0
    %515 = vmatprep.subr.mxu0 0.0
    %516 = vmatpush2.msra.mxu0 0.0
    %517 = vmatprep.subr.mxu0 0.0
    %518 = vmatpush2.msra.mxu0 0.0
    %519 = vmatprep.subr.mxu0 0.0
    %520 = vmatpush2.msra.mxu0 0.0
    %521 = vmatprep.subr.mxu0 0.0
    %522 = vmatpush2.msra.mxu0 0.0
    %523 = vmatprep.subr.mxu0 0.0
    %524 = vmatpush2.msra.mxu0 0.0
    %525 = vmatprep.subr.mxu0 0.0
    %526 = vmatpush2.msra.mxu0 0.0
    %527 = vmatprep.subr.mxu0 0.0
    %528 = vmatpush2.msra.mxu0 0.0
    %529 = vmatprep.subr.mxu0 0.0
    %530 = vmatpush2.msra.mxu0 0.0
    %531 = vmatprep.subr.mxu0 0.0
    %532 = vmatpush2.msra.mxu0 0.0
    %533 = vmatprep.subr.mxu0 0.0
    %534 = vmatpush2.msra.mxu0 0.0
    %535 = vmatprep.subr.mxu0 0.0
    %536 = vmatpush2.msra.mxu0 0.0
    %537 = vmatprep.subr.mxu0 0.0
    %538 = vmatpush2.msra.mxu0 0.0
    %539 = vmatprep.subr.mxu0 0.0
    %540 = vmatpush2.msra.mxu0 0.0
    %541 = vmatprep.subr.mxu0 0.0
    %542 = vmatpush2.msra.mxu0 0.0
    %543 = vmatprep.subr.mxu0 0.0
    %544 = vmatpush2.msra.mxu0 0.0
    %545 = vmatprep.mubr.f32.mxu0 0.0
    %v546 = vand.u32 %v91, 4294901760
    %547 = vmatmul.mubr.f32.gmra.mxu0 %v546
    %v548 = vpop.f32.mrf.mxu0
    %v549 = vadd.f32 %v476, %v548
    %v550 = vpop.f32.mrf.mxu0
    %551 = vdwg.mxu0
    %v552 = vmax.f32 %v549, 0.0
    %v553 = vlaneseq
    %v554 = vshrl.u32 %v553, 7
    %v555 = vsub.s32 0, %v554
    %v556 = vrot.slane %v79, %v555
    %557 = vmatprep.subr.mxu0 0.0
    %v558 = vand.u32 %v45, 4294901760
    %559 = vmatpush1.msra.mxu0 %v558
    %560 = vmatprep.subr.mxu0 0.0
    %v561 = vand.u32 %v44, 4294901760
    %562 = vmatpush1.msra.mxu0 %v561
    %563 = vmatprep.subr.mxu0 0.0
    %v564 = vand.u32 %v43, 4294901760
    %565 = vmatpush1.msra.mxu0 %v564
    %566 = vmatprep.subr.mxu0 0.0
    %v567 = vand.u32 %v42, 4294901760
    %568 = vmatpush1.msra.mxu0 %v567
    %569 = vmatprep.subr.mxu0 0.0
    %v570 = vand.u32 %v41, 4294901760
    %571 = vmatpush1.msra.mxu0 %v570
    %572 = vmatprep.subr.mxu0 0.0
    %v573 = vand.u32 %v40, 4294901760
    %574 = vmatpush1.msra.mxu0 %v573
    %575 = vmatprep.subr.mxu0 0.0
    %v576 = vand.u32 %v39, 4294901760
    %577 = vmatpush1.msra.mxu0 %v576
    %578 = vmatprep.subr.mxu0 0.0
    %v579 = vand.u32 %v38, 4294901760
    %580 = vmatpush1.msra.mxu0 %v579
    %581 = vmatprep.subr.mxu0 0.0
    %v582 = vand.u32 %v37, 4294901760
    %583 = vmatpush1.msra.mxu0 %v582
    %584 = vmatprep.subr.mxu0 0.0
    %v585 = vand.u32 %v36, 4294901760
    %586 = vmatpush1.msra.mxu0 %v585
    %587 = vmatprep.subr.mxu0 0.0
    %v588 = vand.u32 %v35, 4294901760
    %589 = vmatpush1.msra.mxu0 %v588
    %590 = vmatprep.subr.mxu0 0.0
    %v591 = vand.u32 %v34, 4294901760
    %592 = vmatpush1.msra.mxu0 %v591
    %593 = vmatprep.subr.mxu0 0.0
    %v594 = vand.u32 %v33, 4294901760
    %595 = vmatpush1.msra.mxu0 %v594
    %596 = vmatprep.subr.mxu0 0.0
    %v597 = vand.u32 %v32, 4294901760
    %598 = vmatpush1.msra.mxu0 %v597
    %599 = vmatprep.subr.mxu0 0.0
    %v600 = vand.u32 %v31, 4294901760
    %601 = vmatpush1.msra.mxu0 %v600
    %602 = vmatprep.subr.mxu0 0.0
    %v603 = vand.u32 %v30, 4294901760
    %604 = vmatpush1.msra.mxu0 %v603
    %605 = vmatprep.subr.mxu0 0.0
    %606 = vmatpush2.msra.mxu0 0.0
    %607 = vmatprep.subr.mxu0 0.0
    %608 = vmatpush2.msra.mxu0 0.0
    %609 = vmatprep.subr.mxu0 0.0
    %610 = vmatpush2.msra.mxu0 0.0
    %611 = vmatprep.subr.mxu0 0.0
    %612 = vmatpush2.msra.mxu0 0.0
    %613 = vmatprep.subr.mxu0 0.0
    %614 = vmatpush2.msra.mxu0 0.0
    %615 = vmatprep.subr.mxu0 0.0
    %616 = vmatpush2.msra.mxu0 0.0
    %617 = vmatprep.subr.mxu0 0.0
    %618 = vmatpush2.msra.mxu0 0.0
    %619 = vmatprep.subr.mxu0 0.0
    %620 = vmatpush2.msra.mxu0 0.0
    %621 = vmatprep.subr.mxu0 0.0
    %622 = vmatpush2.msra.mxu0 0.0
    %623 = vmatprep.subr.mxu0 0.0
    %624 = vmatpush2.msra.mxu0 0.0
    %625 = vmatprep.subr.mxu0 0.0
    %626 = vmatpush2.msra.mxu0 0.0
    %627 = vmatprep.subr.mxu0 0.0
    %628 = vmatpush2.msra.mxu0 0.0
    %629 = vmatprep.subr.mxu0 0.0
    %630 = vmatpush2.msra.mxu0 0.0
    %631 = vmatprep.subr.mxu0 0.0
    %632 = vmatpush2.msra.mxu0 0.0
    %633 = vmatprep.subr.mxu0 0.0
    %634 = vmatpush2.msra.mxu0 0.0
    %635 = vmatprep.subr.mxu0 0.0
    %636 = vmatpush2.msra.mxu0 0.0
    %637 = vmatprep.mubr.f32.mxu0 0.0
    %v638 = vand.u32 %v552, 4294901760
    %v639 = vsub.f32 %v552, %v638
    %v640 = vand.u32 %v639, 4294901760
    %v641 = vsub.f32 %v639, %v640
    %v642 = vand.u32 %v641, 4294901760
    %643 = vmatmul.mubr.f32.gmra.mxu0 %v642
    %v644 = vpop.f32.mrf.mxu0
    %v645 = vadd.f32 %v556, %v644
    %v646 = vpop.f32.mrf.mxu0
    %647 = vdwg.mxu0
    %648 = vmatprep.subr.mxu0 0.0
    %v649 = vand.u32 %v45, 4294901760
    %v650 = vsub.f32 %v45, %v649
    %v651 = vand.u32 %v650, 4294901760
    %v652 = vsub.f32 %v650, %v651
    %v653 = vand.u32 %v652, 4294901760
    %654 = vmatpush1.msra.mxu0 %v653
    %655 = vmatprep.subr.mxu0 0.0
    %v656 = vand.u32 %v44, 4294901760
    %v657 = vsub.f32 %v44, %v656
    %v658 = vand.u32 %v657, 4294901760
    %v659 = vsub.f32 %v657, %v658
    %v660 = vand.u32 %v659, 4294901760
    %661 = vmatpush1.msra.mxu0 %v660
    %662 = vmatprep.subr.mxu0 0.0
    %v663 = vand.u32 %v43, 4294901760
    %v664 = vsub.f32 %v43, %v663
    %v665 = vand.u32 %v664, 4294901760
    %v666 = vsub.f32 %v664, %v665
    %v667 = vand.u32 %v666, 4294901760
    %668 = vmatpush1.msra.mxu0 %v667
    %669 = vmatprep.subr.mxu0 0.0
    %v670 = vand.u32 %v42, 4294901760
    %v671 = vsub.f32 %v42, %v670
    %v672 = vand.u32 %v671, 4294901760
    %v673 = vsub.f32 %v671, %v672
    %v674 = vand.u32 %v673, 4294901760
    %675 = vmatpush1.msra.mxu0 %v674
    %676 = vmatprep.subr.mxu0 0.0
    %v677 = vand.u32 %v41, 4294901760
    %v678 = vsub.f32 %v41, %v677
    %v679 = vand.u32 %v678, 4294901760
    %v680 = vsub.f32 %v678, %v679
    %v681 = vand.u32 %v680, 4294901760
    %682 = vmatpush1.msra.mxu0 %v681
    %683 = vmatprep.subr.mxu0 0.0
    %v684 = vand.u32 %v40, 4294901760
    %v685 = vsub.f32 %v40, %v684
    %v686 = vand.u32 %v685, 4294901760
    %v687 = vsub.f32 %v685, %v686
    %v688 = vand.u32 %v687, 4294901760
    %689 = vmatpush1.msra.mxu0 %v688
    %690 = vmatprep.subr.mxu0 0.0
    %v691 = vand.u32 %v39, 4294901760
    %v692 = vsub.f32 %v39, %v691
    %v693 = vand.u32 %v692, 4294901760
    %v694 = vsub.f32 %v692, %v693
    %v695 = vand.u32 %v694, 4294901760
    %696 = vmatpush1.msra.mxu0 %v695
    %697 = vmatprep.subr.mxu0 0.0
    %v698 = vand.u32 %v38, 4294901760
    %v699 = vsub.f32 %v38, %v698
    %v700 = vand.u32 %v699, 4294901760
    %v701 = vsub.f32 %v699, %v700
    %v702 = vand.u32 %v701, 4294901760
    %703 = vmatpush1.msra.mxu0 %v702
    %704 = vmatprep.subr.mxu0 0.0
    %v705 = vand.u32 %v37, 4294901760
    %v706 = vsub.f32 %v37, %v705
    %v707 = vand.u32 %v706, 4294901760
    %v708 = vsub.f32 %v706, %v707
    %v709 = vand.u32 %v708, 4294901760
    %710 = vmatpush1.msra.mxu0 %v709
    %711 = vmatprep.subr.mxu0 0.0
    %v712 = vand.u32 %v36, 4294901760
    %v713 = vsub.f32 %v36, %v712
    %v714 = vand.u32 %v713, 4294901760
    %v715 = vsub.f32 %v713, %v714
    %v716 = vand.u32 %v715, 4294901760
    %717 = vmatpush1.msra.mxu0 %v716
    %718 = vmatprep.subr.mxu0 0.0
    %v719 = vand.u32 %v35, 4294901760
    %v720 = vsub.f32 %v35, %v719
    %v721 = vand.u32 %v720, 4294901760
    %v722 = vsub.f32 %v720, %v721
    %v723 = vand.u32 %v722, 4294901760
    %724 = vmatpush1.msra.mxu0 %v723
    %725 = vmatprep.subr.mxu0 0.0
    %v726 = vand.u32 %v34, 4294901760
    %v727 = vsub.f32 %v34, %v726
    %v728 = vand.u32 %v727, 4294901760
    %v729 = vsub.f32 %v727, %v728
    %v730 = vand.u32 %v729, 4294901760
    %731 = vmatpush1.msra.mxu0 %v730
    %732 = vmatprep.subr.mxu0 0.0
    %v733 = vand.u32 %v33, 4294901760
    %v734 = vsub.f32 %v33, %v733
    %v735 = vand.u32 %v734, 4294901760
    %v736 = vsub.f32 %v734, %v735
    %v737 = vand.u32 %v736, 4294901760
    %738 = vmatpush1.msra.mxu0 %v737
    %739 = vmatprep.subr.mxu0 0.0
    %v740 = vand.u32 %v32, 4294901760
    %v741 = vsub.f32 %v32, %v740
    %v742 = vand.u32 %v741, 4294901760
    %v743 = vsub.f32 %v741, %v742
    %v744 = vand.u32 %v743, 4294901760
    %745 = vmatpush1.msra.mxu0 %v744
    %746 = vmatprep.subr.mxu0 0.0
    %v747 = vand.u32 %v31, 4294901760
    %v748 = vsub.f32 %v31, %v747
    %v749 = vand.u32 %v748, 4294901760
    %v750 = vsub.f32 %v748, %v749
    %v751 = vand.u32 %v750, 4294901760
    %752 = vmatpush1.msra.mxu0 %v751
    %753 = vmatprep.subr.mxu0 0.0
    %v754 = vand.u32 %v30, 4294901760
    %v755 = vsub.f32 %v30, %v754
    %v756 = vand.u32 %v755, 4294901760
    %v757 = vsub.f32 %v755, %v756
    %v758 = vand.u32 %v757, 4294901760
    %759 = vmatpush1.msra.mxu0 %v758
    %760 = vmatprep.subr.mxu0 0.0
    %761 = vmatpush2.msra.mxu0 0.0
    %762 = vmatprep.subr.mxu0 0.0
    %763 = vmatpush2.msra.mxu0 0.0
    %764 = vmatprep.subr.mxu0 0.0
    %765 = vmatpush2.msra.mxu0 0.0
    %766 = vmatprep.subr.mxu0 0.0
    %767 = vmatpush2.msra.mxu0 0.0
    %768 = vmatprep.subr.mxu0 0.0
    %769 = vmatpush2.msra.mxu0 0.0
    %770 = vmatprep.subr.mxu0 0.0
    %771 = vmatpush2.msra.mxu0 0.0
    %772 = vmatprep.subr.mxu0 0.0
    %773 = vmatpush2.msra.mxu0 0.0
    %774 = vmatprep.subr.mxu0 0.0
    %775 = vmatpush2.msra.mxu0 0.0
    %776 = vmatprep.subr.mxu0 0.0
    %777 = vmatpush2.msra.mxu0 0.0
    %778 = vmatprep.subr.mxu0 0.0
    %779 = vmatpush2.msra.mxu0 0.0
    %780 = vmatprep.subr.mxu0 0.0
    %781 = vmatpush2.msra.mxu0 0.0
    %782 = vmatprep.subr.mxu0 0.0
    %783 = vmatpush2.msra.mxu0 0.0
    %784 = vmatprep.subr.mxu0 0.0
    %785 = vmatpush2.msra.mxu0 0.0
    %786 = vmatprep.subr.mxu0 0.0
    %787 = vmatpush2.msra.mxu0 0.0
    %788 = vmatprep.subr.mxu0 0.0
    %789 = vmatpush2.msra.mxu0 0.0
    %790 = vmatprep.subr.mxu0 0.0
    %791 = vmatpush2.msra.mxu0 0.0
    %792 = vmatprep.mubr.f32.mxu0 0.0
    %v793 = vand.u32 %v552, 4294901760
    %794 = vmatmul.mubr.f32.gmra.mxu0 %v793
    %v795 = vpop.f32.mrf.mxu0
    %v796 = vadd.f32 %v645, %v795
    %v797 = vpop.f32.mrf.mxu0
    %798 = vdwg.mxu0
    %799 = vmatprep.subr.mxu0 0.0
    %v800 = vand.u32 %v45, 4294901760
    %v801 = vsub.f32 %v45, %v800
    %802 = vmatpush1.msra.mxu0 %v801
    %803 = vmatprep.subr.mxu0 0.0
    %v804 = vand.u32 %v44, 4294901760
    %v805 = vsub.f32 %v44, %v804
    %806 = vmatpush1.msra.mxu0 %v805
    %807 = vmatprep.subr.mxu0 0.0
    %v808 = vand.u32 %v43, 4294901760
    %v809 = vsub.f32 %v43, %v808
    %810 = vmatpush1.msra.mxu0 %v809
    %811 = vmatprep.subr.mxu0 0.0
    %v812 = vand.u32 %v42, 4294901760
    %v813 = vsub.f32 %v42, %v812
    %814 = vmatpush1.msra.mxu0 %v813
    %815 = vmatprep.subr.mxu0 0.0
    %v816 = vand.u32 %v41, 4294901760
    %v817 = vsub.f32 %v41, %v816
    %818 = vmatpush1.msra.mxu0 %v817
    %819 = vmatprep.subr.mxu0 0.0
    %v820 = vand.u32 %v40, 4294901760
    %v821 = vsub.f32 %v40, %v820
    %822 = vmatpush1.msra.mxu0 %v821
    %823 = vmatprep.subr.mxu0 0.0
    %v824 = vand.u32 %v39, 4294901760
    %v825 = vsub.f32 %v39, %v824
    %826 = vmatpush1.msra.mxu0 %v825
    %827 = vmatprep.subr.mxu0 0.0
    %v828 = vand.u32 %v38, 4294901760
    %v829 = vsub.f32 %v38, %v828
    %830 = vmatpush1.msra.mxu0 %v829
    %831 = vmatprep.subr.mxu0 0.0
    %v832 = vand.u32 %v37, 4294901760
    %v833 = vsub.f32 %v37, %v832
    %834 = vmatpush1.msra.mxu0 %v833
    %835 = vmatprep.subr.mxu0 0.0
    %v836 = vand.u32 %v36, 4294901760
    %v837 = vsub.f32 %v36, %v836
    %838 = vmatpush1.msra.mxu0 %v837
    %839 = vmatprep.subr.mxu0 0.0
    %v840 = vand.u32 %v35, 4294901760
    %v841 = vsub.f32 %v35, %v840
    %842 = vmatpush1.msra.mxu0 %v841
    %843 = vmatprep.subr.mxu0 0.0
    %v844 = vand.u32 %v34, 4294901760
    %v845 = vsub.f32 %v34, %v844
    %846 = vmatpush1.msra.mxu0 %v845
    %847 = vmatprep.subr.mxu0 0.0
    %v848 = vand.u32 %v33, 4294901760
    %v849 = vsub.f32 %v33, %v848
    %850 = vmatpush1.msra.mxu0 %v849
    %851 = vmatprep.subr.mxu0 0.0
    %v852 = vand.u32 %v32, 4294901760
    %v853 = vsub.f32 %v32, %v852
    %854 = vmatpush1.msra.mxu0 %v853
    %855 = vmatprep.subr.mxu0 0.0
    %v856 = vand.u32 %v31, 4294901760
    %v857 = vsub.f32 %v31, %v856
    %858 = vmatpush1.msra.mxu0 %v857
    %859 = vmatprep.subr.mxu0 0.0
    %v860 = vand.u32 %v30, 4294901760
    %v861 = vsub.f32 %v30, %v860
    %862 = vmatpush1.msra.mxu0 %v861
    %863 = vmatprep.subr.mxu0 0.0
    %864 = vmatpush2.msra.mxu0 0.0
    %865 = vmatprep.subr.mxu0 0.0
    %866 = vmatpush2.msra.mxu0 0.0
    %867 = vmatprep.subr.mxu0 0.0
    %868 = vmatpush2.msra.mxu0 0.0
    %869 = vmatprep.subr.mxu0 0.0
    %870 = vmatpush2.msra.mxu0 0.0
    %871 = vmatprep.subr.mxu0 0.0
    %872 = vmatpush2.msra.mxu0 0.0
    %873 = vmatprep.subr.mxu0 0.0
    %874 = vmatpush2.msra.mxu0 0.0
    %875 = vmatprep.subr.mxu0 0.0
    %876 = vmatpush2.msra.mxu0 0.0
    %877 = vmatprep.subr.mxu0 0.0
    %878 = vmatpush2.msra.mxu0 0.0
    %879 = vmatprep.subr.mxu0 0.0
    %880 = vmatpush2.msra.mxu0 0.0
    %881 = vmatprep.subr.mxu0 0.0
    %882 = vmatpush2.msra.mxu0 0.0
    %883 = vmatprep.subr.mxu0 0.0
    %884 = vmatpush2.msra.mxu0 0.0
    %885 = vmatprep.subr.mxu0 0.0
    %886 = vmatpush2.msra.mxu0 0.0
    %887 = vmatprep.subr.mxu0 0.0
    %888 = vmatpush2.msra.mxu0 0.0
    %889 = vmatprep.subr.mxu0 0.0
    %890 = vmatpush2.msra.mxu0 0.0
    %891 = vmatprep.subr.mxu0 0.0
    %892 = vmatpush2.msra.mxu0 0.0
    %893 = vmatprep.subr.mxu0 0.0
    %894 = vmatpush2.msra.mxu0 0.0
    %895 = vmatprep.mubr.f32.mxu0 0.0
    %v896 = vand.u32 %v552, 4294901760
    %v897 = vsub.f32 %v552, %v896
    %898 = vmatmul.mubr.f32.gmra.mxu0 %v897
    %v899 = vpop.f32.mrf.mxu0
    %v900 = vadd.f32 %v796, %v899
    %v901 = vpop.f32.mrf.mxu0
    %902 = vdwg.mxu0
    %903 = vmatprep.subr.mxu0 0.0
    %v904 = vand.u32 %v45, 4294901760
    %905 = vmatpush1.msra.mxu0 %v904
    %906 = vmatprep.subr.mxu0 0.0
    %v907 = vand.u32 %v44, 4294901760
    %908 = vmatpush1.msra.mxu0 %v907
    %909 = vmatprep.subr.mxu0 0.0
    %v910 = vand.u32 %v43, 4294901760
    %911 = vmatpush1.msra.mxu0 %v910
    %912 = vmatprep.subr.mxu0 0.0
    %v913 = vand.u32 %v42, 4294901760
    %914 = vmatpush1.msra.mxu0 %v913
    %915 = vmatprep.subr.mxu0 0.0
    %v916 = vand.u32 %v41, 4294901760
    %917 = vmatpush1.msra.mxu0 %v916
    %918 = vmatprep.subr.mxu0 0.0
    %v919 = vand.u32 %v40, 4294901760
    %920 = vmatpush1.msra.mxu0 %v919
    %921 = vmatprep.subr.mxu0 0.0
    %v922 = vand.u32 %v39, 4294901760
    %923 = vmatpush1.msra.mxu0 %v922
    %924 = vmatprep.subr.mxu0 0.0
    %v925 = vand.u32 %v38, 4294901760
    %926 = vmatpush1.msra.mxu0 %v925
    %927 = vmatprep.subr.mxu0 0.0
    %v928 = vand.u32 %v37, 4294901760
    %929 = vmatpush1.msra.mxu0 %v928
    %930 = vmatprep.subr.mxu0 0.0
    %v931 = vand.u32 %v36, 4294901760
    %932 = vmatpush1.msra.mxu0 %v931
    %933 = vmatprep.subr.mxu0 0.0
    %v934 = vand.u32 %v35, 4294901760
    %935 = vmatpush1.msra.mxu0 %v934
    %936 = vmatprep.subr.mxu0 0.0
    %v937 = vand.u32 %v34, 4294901760
    %938 = vmatpush1.msra.mxu0 %v937
    %939 = vmatprep.subr.mxu0 0.0
    %v940 = vand.u32 %v33, 4294901760
    %941 = vmatpush1.msra.mxu0 %v940
    %942 = vmatprep.subr.mxu0 0.0
    %v943 = vand.u32 %v32, 4294901760
    %944 = vmatpush1.msra.mxu0 %v943
    %945 = vmatprep.subr.mxu0 0.0
    %v946 = vand.u32 %v31, 4294901760
    %947 = vmatpush1.msra.mxu0 %v946
    %948 = vmatprep.subr.mxu0 0.0
    %v949 = vand.u32 %v30, 4294901760
    %950 = vmatpush1.msra.mxu0 %v949
    %951 = vmatprep.subr.mxu0 0.0
    %952 = vmatpush2.msra.mxu0 0.0
    %953 = vmatprep.subr.mxu0 0.0
    %954 = vmatpush2.msra.mxu0 0.0
    %955 = vmatprep.subr.mxu0 0.0
    %956 = vmatpush2.msra.mxu0 0.0
    %957 = vmatprep.subr.mxu0 0.0
    %958 = vmatpush2.msra.mxu0 0.0
    %959 = vmatprep.subr.mxu0 0.0
    %960 = vmatpush2.msra.mxu0 0.0
    %961 = vmatprep.subr.mxu0 0.0
    %962 = vmatpush2.msra.mxu0 0.0
    %963 = vmatprep.subr.mxu0 0.0
    %964 = vmatpush2.msra.mxu0 0.0
    %965 = vmatprep.subr.mxu0 0.0
    %966 = vmatpush2.msra.mxu0 0.0
    %967 = vmatprep.subr.mxu0 0.0
    %968 = vmatpush2.msra.mxu0 0.0
    %969 = vmatprep.subr.mxu0 0.0
    %970 = vmatpush2.msra.mxu0 0.0
    %971 = vmatprep.subr.mxu0 0.0
    %972 = vmatpush2.msra.mxu0 0.0
    %973 = vmatprep.subr.mxu0 0.0
    %974 = vmatpush2.msra.mxu0 0.0
    %975 = vmatprep.subr.mxu0 0.0
    %976 = vmatpush2.msra.mxu0 0.0
    %977 = vmatprep.subr.mxu0 0.0
    %978 = vmatpush2.msra.mxu0 0.0
    %979 = vmatprep.subr.mxu0 0.0
    %980 = vmatpush2.msra.mxu0 0.0
    %981 = vmatprep.subr.mxu0 0.0
    %982 = vmatpush2.msra.mxu0 0.0
    %983 = vmatprep.mubr.f32.mxu0 0.0
    %v984 = vand.u32 %v552, 4294901760
    %v985 = vsub.f32 %v552, %v984
    %v986 = vand.u32 %v985, 4294901760
    %987 = vmatmul.mubr.f32.gmra.mxu0 %v986
    %v988 = vpop.f32.mrf.mxu0
    %v989 = vadd.f32 %v900, %v988
    %v990 = vpop.f32.mrf.mxu0
    %991 = vdwg.mxu0
    %992 = vmatprep.subr.mxu0 0.0
    %v993 = vand.u32 %v45, 4294901760
    %v994 = vsub.f32 %v45, %v993
    %v995 = vand.u32 %v994, 4294901760
    %996 = vmatpush1.msra.mxu0 %v995
    %997 = vmatprep.subr.mxu0 0.0
    %v998 = vand.u32 %v44, 4294901760
    %v999 = vsub.f32 %v44, %v998
    %v1000 = vand.u32 %v999, 4294901760
    %1001 = vmatpush1.msra.mxu0 %v1000
    %1002 = vmatprep.subr.mxu0 0.0
    %v1003 = vand.u32 %v43, 4294901760
    %v1004 = vsub.f32 %v43, %v1003
    %v1005 = vand.u32 %v1004, 4294901760
    %1006 = vmatpush1.msra.mxu0 %v1005
    %1007 = vmatprep.subr.mxu0 0.0
    %v1008 = vand.u32 %v42, 4294901760
    %v1009 = vsub.f32 %v42, %v1008
    %v1010 = vand.u32 %v1009, 4294901760
    %1011 = vmatpush1.msra.mxu0 %v1010
    %1012 = vmatprep.subr.mxu0 0.0
    %v1013 = vand.u32 %v41, 4294901760
    %v1014 = vsub.f32 %v41, %v1013
    %v1015 = vand.u32 %v1014, 4294901760
    %1016 = vmatpush1.msra.mxu0 %v1015
    %1017 = vmatprep.subr.mxu0 0.0
    %v1018 = vand.u32 %v40, 4294901760
    %v1019 = vsub.f32 %v40, %v1018
    %v1020 = vand.u32 %v1019, 4294901760
    %1021 = vmatpush1.msra.mxu0 %v1020
    %1022 = vmatprep.subr.mxu0 0.0
    %v1023 = vand.u32 %v39, 4294901760
    %v1024 = vsub.f32 %v39, %v1023
    %v1025 = vand.u32 %v1024, 4294901760
    %1026 = vmatpush1.msra.mxu0 %v1025
    %1027 = vmatprep.subr.mxu0 0.0
    %v1028 = vand.u32 %v38, 4294901760
    %v1029 = vsub.f32 %v38, %v1028
    %v1030 = vand.u32 %v1029, 4294901760
    %1031 = vmatpush1.msra.mxu0 %v1030
    %1032 = vmatprep.subr.mxu0 0.0
    %v1033 = vand.u32 %v37, 4294901760
    %v1034 = vsub.f32 %v37, %v1033
    %v1035 = vand.u32 %v1034, 4294901760
    %1036 = vmatpush1.msra.mxu0 %v1035
    %1037 = vmatprep.subr.mxu0 0.0
    %v1038 = vand.u32 %v36, 4294901760
    %v1039 = vsub.f32 %v36, %v1038
    %v1040 = vand.u32 %v1039, 4294901760
    %1041 = vmatpush1.msra.mxu0 %v1040
    %1042 = vmatprep.subr.mxu0 0.0
    %v1043 = vand.u32 %v35, 4294901760
    %v1044 = vsub.f32 %v35, %v1043
    %v1045 = vand.u32 %v1044, 4294901760
    %1046 = vmatpush1.msra.mxu0 %v1045
    %1047 = vmatprep.subr.mxu0 0.0
    %v1048 = vand.u32 %v34, 4294901760
    %v1049 = vsub.f32 %v34, %v1048
    %v1050 = vand.u32 %v1049, 4294901760
    %1051 = vmatpush1.msra.mxu0 %v1050
    %1052 = vmatprep.subr.mxu0 0.0
    %v1053 = vand.u32 %v33, 4294901760
    %v1054 = vsub.f32 %v33, %v1053
    %v1055 = vand.u32 %v1054, 4294901760
    %1056 = vmatpush1.msra.mxu0 %v1055
    %1057 = vmatprep.subr.mxu0 0.0
    %v1058 = vand.u32 %v32, 4294901760
    %v1059 = vsub.f32 %v32, %v1058
    %v1060 = vand.u32 %v1059, 4294901760
    %1061 = vmatpush1.msra.mxu0 %v1060
    %1062 = vmatprep.subr.mxu0 0.0
    %v1063 = vand.u32 %v31, 4294901760
    %v1064 = vsub.f32 %v31, %v1063
    %v1065 = vand.u32 %v1064, 4294901760
    %1066 = vmatpush1.msra.mxu0 %v1065
    %1067 = vmatprep.subr.mxu0 0.0
    %v1068 = vand.u32 %v30, 4294901760
    %v1069 = vsub.f32 %v30, %v1068
    %v1070 = vand.u32 %v1069, 4294901760
    %1071 = vmatpush1.msra.mxu0 %v1070
    %1072 = vmatprep.subr.mxu0 0.0
    %1073 = vmatpush2.msra.mxu0 0.0
    %1074 = vmatprep.subr.mxu0 0.0
    %1075 = vmatpush2.msra.mxu0 0.0
    %1076 = vmatprep.subr.mxu0 0.0
    %1077 = vmatpush2.msra.mxu0 0.0
    %1078 = vmatprep.subr.mxu0 0.0
    %1079 = vmatpush2.msra.mxu0 0.0
    %1080 = vmatprep.subr.mxu0 0.0
    %1081 = vmatpush2.msra.mxu0 0.0
    %1082 = vmatprep.subr.mxu0 0.0
    %1083 = vmatpush2.msra.mxu0 0.0
    %1084 = vmatprep.subr.mxu0 0.0
    %1085 = vmatpush2.msra.mxu0 0.0
    %1086 = vmatprep.subr.mxu0 0.0
    %1087 = vmatpush2.msra.mxu0 0.0
    %1088 = vmatprep.subr.mxu0 0.0
    %1089 = vmatpush2.msra.mxu0 0.0
    %1090 = vmatprep.subr.mxu0 0.0
    %1091 = vmatpush2.msra.mxu0 0.0
    %1092 = vmatprep.subr.mxu0 0.0
    %1093 = vmatpush2.msra.mxu0 0.0
    %1094 = vmatprep.subr.mxu0 0.0
    %1095 = vmatpush2.msra.mxu0 0.0
    %1096 = vmatprep.subr.mxu0 0.0
    %1097 = vmatpush2.msra.mxu0 0.0
    %1098 = vmatprep.subr.mxu0 0.0
    %1099 = vmatpush2.msra.mxu0 0.0
    %1100 = vmatprep.subr.mxu0 0.0
    %1101 = vmatpush2.msra.mxu0 0.0
    %1102 = vmatprep.subr.mxu0 0.0
    %1103 = vmatpush2.msra.mxu0 0.0
    %1104 = vmatprep.mubr.f32.mxu0 0.0
    %v1105 = vand.u32 %v552, 4294901760
    %1106 = vmatmul.mubr.f32.gmra.mxu0 %v1105
    %v1107 = vpop.f32.mrf.mxu0
    %v1108 = vadd.f32 %v989, %v1107
    %v1109 = vpop.f32.mrf.mxu0
    %1110 = vdwg.mxu0
    %1111 = vmatprep.subr.mxu0 0.0
    %v1112 = vand.u32 %v45, 4294901760
    %1113 = vmatpush1.msra.mxu0 %v1112
    %1114 = vmatprep.subr.mxu0 0.0
    %v1115 = vand.u32 %v44, 4294901760
    %1116 = vmatpush1.msra.mxu0 %v1115
    %1117 = vmatprep.subr.mxu0 0.0
    %v1118 = vand.u32 %v43, 4294901760
    %1119 = vmatpush1.msra.mxu0 %v1118
    %1120 = vmatprep.subr.mxu0 0.0
    %v1121 = vand.u32 %v42, 4294901760
    %1122 = vmatpush1.msra.mxu0 %v1121
    %1123 = vmatprep.subr.mxu0 0.0
    %v1124 = vand.u32 %v41, 4294901760
    %1125 = vmatpush1.msra.mxu0 %v1124
    %1126 = vmatprep.subr.mxu0 0.0
    %v1127 = vand.u32 %v40, 4294901760
    %1128 = vmatpush1.msra.mxu0 %v1127
    %1129 = vmatprep.subr.mxu0 0.0
    %v1130 = vand.u32 %v39, 4294901760
    %1131 = vmatpush1.msra.mxu0 %v1130
    %1132 = vmatprep.subr.mxu0 0.0
    %v1133 = vand.u32 %v38, 4294901760
    %1134 = vmatpush1.msra.mxu0 %v1133
    %1135 = vmatprep.subr.mxu0 0.0
    %v1136 = vand.u32 %v37, 4294901760
    %1137 = vmatpush1.msra.mxu0 %v1136
    %1138 = vmatprep.subr.mxu0 0.0
    %v1139 = vand.u32 %v36, 4294901760
    %1140 = vmatpush1.msra.mxu0 %v1139
    %1141 = vmatprep.subr.mxu0 0.0
    %v1142 = vand.u32 %v35, 4294901760
    %1143 = vmatpush1.msra.mxu0 %v1142
    %1144 = vmatprep.subr.mxu0 0.0
    %v1145 = vand.u32 %v34, 4294901760
    %1146 = vmatpush1.msra.mxu0 %v1145
    %1147 = vmatprep.subr.mxu0 0.0
    %v1148 = vand.u32 %v33, 4294901760
    %1149 = vmatpush1.msra.mxu0 %v1148
    %1150 = vmatprep.subr.mxu0 0.0
    %v1151 = vand.u32 %v32, 4294901760
    %1152 = vmatpush1.msra.mxu0 %v1151
    %1153 = vmatprep.subr.mxu0 0.0
    %v1154 = vand.u32 %v31, 4294901760
    %1155 = vmatpush1.msra.mxu0 %v1154
    %1156 = vmatprep.subr.mxu0 0.0
    %v1157 = vand.u32 %v30, 4294901760
    %1158 = vmatpush1.msra.mxu0 %v1157
    %1159 = vmatprep.subr.mxu0 0.0
    %1160 = vmatpush2.msra.mxu0 0.0
    %1161 = vmatprep.subr.mxu0 0.0
    %1162 = vmatpush2.msra.mxu0 0.0
    %1163 = vmatprep.subr.mxu0 0.0
    %1164 = vmatpush2.msra.mxu0 0.0
    %1165 = vmatprep.subr.mxu0 0.0
    %1166 = vmatpush2.msra.mxu0 0.0
    %1167 = vmatprep.subr.mxu0 0.0
    %1168 = vmatpush2.msra.mxu0 0.0
    %1169 = vmatprep.subr.mxu0 0.0
    %1170 = vmatpush2.msra.mxu0 0.0
    %1171 = vmatprep.subr.mxu0 0.0
    %1172 = vmatpush2.msra.mxu0 0.0
    %1173 = vmatprep.subr.mxu0 0.0
    %1174 = vmatpush2.msra.mxu0 0.0
    %1175 = vmatprep.subr.mxu0 0.0
    %1176 = vmatpush2.msra.mxu0 0.0
    %1177 = vmatprep.subr.mxu0 0.0
    %1178 = vmatpush2.msra.mxu0 0.0
    %1179 = vmatprep.subr.mxu0 0.0
    %1180 = vmatpush2.msra.mxu0 0.0
    %1181 = vmatprep.subr.mxu0 0.0
    %1182 = vmatpush2.msra.mxu0 0.0
    %1183 = vmatprep.subr.mxu0 0.0
    %1184 = vmatpush2.msra.mxu0 0.0
    %1185 = vmatprep.subr.mxu0 0.0
    %1186 = vmatpush2.msra.mxu0 0.0
    %1187 = vmatprep.subr.mxu0 0.0
    %1188 = vmatpush2.msra.mxu0 0.0
    %1189 = vmatprep.subr.mxu0 0.0
    %1190 = vmatpush2.msra.mxu0 0.0
    %1191 = vmatprep.mubr.f32.mxu0 0.0
    %v1192 = vand.u32 %v552, 4294901760
    %1193 = vmatmul.mubr.f32.gmra.mxu0 %v1192
    %v1194 = vpop.f32.mrf.mxu0
    %v1195 = vadd.f32 %v1108, %v1194
    %v1196 = vpop.f32.mrf.mxu0
    %1197 = vdwg.mxu0
    %v1198 = vmax.f32 %v1195, 0.0
    %v1199 = vlaneseq
    %v1200 = vshrl.u32 %v1199, 7
    %v1201 = vsub.s32 0, %v1200
    %v1202 = vrot.slane %v80, %v1201
    %1203 = vmatprep.subr.mxu0 0.0
    %v1204 = vand.u32 %v61, 4294901760
    %1205 = vmatpush1.msra.mxu0 %v1204
    %1206 = vmatprep.subr.mxu0 0.0
    %v1207 = vand.u32 %v60, 4294901760
    %1208 = vmatpush1.msra.mxu0 %v1207
    %1209 = vmatprep.subr.mxu0 0.0
    %v1210 = vand.u32 %v59, 4294901760
    %1211 = vmatpush1.msra.mxu0 %v1210
    %1212 = vmatprep.subr.mxu0 0.0
    %v1213 = vand.u32 %v58, 4294901760
    %1214 = vmatpush1.msra.mxu0 %v1213
    %1215 = vmatprep.subr.mxu0 0.0
    %v1216 = vand.u32 %v57, 4294901760
    %1217 = vmatpush1.msra.mxu0 %v1216
    %1218 = vmatprep.subr.mxu0 0.0
    %v1219 = vand.u32 %v56, 4294901760
    %1220 = vmatpush1.msra.mxu0 %v1219
    %1221 = vmatprep.subr.mxu0 0.0
    %v1222 = vand.u32 %v55, 4294901760
    %1223 = vmatpush1.msra.mxu0 %v1222
    %1224 = vmatprep.subr.mxu0 0.0
    %v1225 = vand.u32 %v54, 4294901760
    %1226 = vmatpush1.msra.mxu0 %v1225
    %1227 = vmatprep.subr.mxu0 0.0
    %v1228 = vand.u32 %v53, 4294901760
    %1229 = vmatpush1.msra.mxu0 %v1228
    %1230 = vmatprep.subr.mxu0 0.0
    %v1231 = vand.u32 %v52, 4294901760
    %1232 = vmatpush1.msra.mxu0 %v1231
    %1233 = vmatprep.subr.mxu0 0.0
    %v1234 = vand.u32 %v51, 4294901760
    %1235 = vmatpush1.msra.mxu0 %v1234
    %1236 = vmatprep.subr.mxu0 0.0
    %v1237 = vand.u32 %v50, 4294901760
    %1238 = vmatpush1.msra.mxu0 %v1237
    %1239 = vmatprep.subr.mxu0 0.0
    %v1240 = vand.u32 %v49, 4294901760
    %1241 = vmatpush1.msra.mxu0 %v1240
    %1242 = vmatprep.subr.mxu0 0.0
    %v1243 = vand.u32 %v48, 4294901760
    %1244 = vmatpush1.msra.mxu0 %v1243
    %1245 = vmatprep.subr.mxu0 0.0
    %v1246 = vand.u32 %v47, 4294901760
    %1247 = vmatpush1.msra.mxu0 %v1246
    %1248 = vmatprep.subr.mxu0 0.0
    %v1249 = vand.u32 %v46, 4294901760
    %1250 = vmatpush1.msra.mxu0 %v1249
    %1251 = vmatprep.subr.mxu0 0.0
    %1252 = vmatpush2.msra.mxu0 0.0
    %1253 = vmatprep.subr.mxu0 0.0
    %1254 = vmatpush2.msra.mxu0 0.0
    %1255 = vmatprep.subr.mxu0 0.0
    %1256 = vmatpush2.msra.mxu0 0.0
    %1257 = vmatprep.subr.mxu0 0.0
    %1258 = vmatpush2.msra.mxu0 0.0
    %1259 = vmatprep.subr.mxu0 0.0
    %1260 = vmatpush2.msra.mxu0 0.0
    %1261 = vmatprep.subr.mxu0 0.0
    %1262 = vmatpush2.msra.mxu0 0.0
    %1263 = vmatprep.subr.mxu0 0.0
    %1264 = vmatpush2.msra.mxu0 0.0
    %1265 = vmatprep.subr.mxu0 0.0
    %1266 = vmatpush2.msra.mxu0 0.0
    %1267 = vmatprep.subr.mxu0 0.0
    %1268 = vmatpush2.msra.mxu0 0.0
    %1269 = vmatprep.subr.mxu0 0.0
    %1270 = vmatpush2.msra.mxu0 0.0
    %1271 = vmatprep.subr.mxu0 0.0
    %1272 = vmatpush2.msra.mxu0 0.0
    %1273 = vmatprep.subr.mxu0 0.0
    %1274 = vmatpush2.msra.mxu0 0.0
    %1275 = vmatprep.subr.mxu0 0.0
    %1276 = vmatpush2.msra.mxu0 0.0
    %1277 = vmatprep.subr.mxu0 0.0
    %1278 = vmatpush2.msra.mxu0 0.0
    %1279 = vmatprep.subr.mxu0 0.0
    %1280 = vmatpush2.msra.mxu0 0.0
    %1281 = vmatprep.subr.mxu0 0.0
    %1282 = vmatpush2.msra.mxu0 0.0
    %1283 = vmatprep.mubr.f32.mxu0 0.0
    %v1284 = vand.u32 %v1198, 4294901760
    %v1285 = vsub.f32 %v1198, %v1284
    %v1286 = vand.u32 %v1285, 4294901760
    %v1287 = vsub.f32 %v1285, %v1286
    %v1288 = vand.u32 %v1287, 4294901760
    %1289 = vmatmul.mubr.f32.gmra.mxu0 %v1288
    %v1290 = vpop.f32.mrf.mxu0
    %v1291 = vadd.f32 %v1202, %v1290
    %v1292 = vpop.f32.mrf.mxu0
    %1293 = vdwg.mxu0
    %1294 = vmatprep.subr.mxu0 0.0
    %v1295 = vand.u32 %v61, 4294901760
    %v1296 = vsub.f32 %v61, %v1295
    %v1297 = vand.u32 %v1296, 4294901760
    %v1298 = vsub.f32 %v1296, %v1297
    %v1299 = vand.u32 %v1298, 4294901760
    %1300 = vmatpush1.msra.mxu0 %v1299
    %1301 = vmatprep.subr.mxu0 0.0
    %v1302 = vand.u32 %v60, 4294901760
    %v1303 = vsub.f32 %v60, %v1302
    %v1304 = vand.u32 %v1303, 4294901760
    %v1305 = vsub.f32 %v1303, %v1304
    %v1306 = vand.u32 %v1305, 4294901760
    %1307 = vmatpush1.msra.mxu0 %v1306
    %1308 = vmatprep.subr.mxu0 0.0
    %v1309 = vand.u32 %v59, 4294901760
    %v1310 = vsub.f32 %v59, %v1309
    %v1311 = vand.u32 %v1310, 4294901760
    %v1312 = vsub.f32 %v1310, %v1311
    %v1313 = vand.u32 %v1312, 4294901760
    %1314 = vmatpush1.msra.mxu0 %v1313
    %1315 = vmatprep.subr.mxu0 0.0
    %v1316 = vand.u32 %v58, 4294901760
    %v1317 = vsub.f32 %v58, %v1316
    %v1318 = vand.u32 %v1317, 4294901760
    %v1319 = vsub.f32 %v1317, %v1318
    %v1320 = vand.u32 %v1319, 4294901760
    %1321 = vmatpush1.msra.mxu0 %v1320
    %1322 = vmatprep.subr.mxu0 0.0
    %v1323 = vand.u32 %v57, 4294901760
    %v1324 = vsub.f32 %v57, %v1323
    %v1325 = vand.u32 %v1324, 4294901760
    %v1326 = vsub.f32 %v1324, %v1325
    %v1327 = vand.u32 %v1326, 4294901760
    %1328 = vmatpush1.msra.mxu0 %v1327
    %1329 = vmatprep.subr.mxu0 0.0
    %v1330 = vand.u32 %v56, 4294901760
    %v1331 = vsub.f32 %v56, %v1330
    %v1332 = vand.u32 %v1331, 4294901760
    %v1333 = vsub.f32 %v1331, %v1332
    %v1334 = vand.u32 %v1333, 4294901760
    %1335 = vmatpush1.msra.mxu0 %v1334
    %1336 = vmatprep.subr.mxu0 0.0
    %v1337 = vand.u32 %v55, 4294901760
    %v1338 = vsub.f32 %v55, %v1337
    %v1339 = vand.u32 %v1338, 4294901760
    %v1340 = vsub.f32 %v1338, %v1339
    %v1341 = vand.u32 %v1340, 4294901760
    %1342 = vmatpush1.msra.mxu0 %v1341
    %1343 = vmatprep.subr.mxu0 0.0
    %v1344 = vand.u32 %v54, 4294901760
    %v1345 = vsub.f32 %v54, %v1344
    %v1346 = vand.u32 %v1345, 4294901760
    %v1347 = vsub.f32 %v1345, %v1346
    %v1348 = vand.u32 %v1347, 4294901760
    %1349 = vmatpush1.msra.mxu0 %v1348
    %1350 = vmatprep.subr.mxu0 0.0
    %v1351 = vand.u32 %v53, 4294901760
    %v1352 = vsub.f32 %v53, %v1351
    %v1353 = vand.u32 %v1352, 4294901760
    %v1354 = vsub.f32 %v1352, %v1353
    %v1355 = vand.u32 %v1354, 4294901760
    %1356 = vmatpush1.msra.mxu0 %v1355
    %1357 = vmatprep.subr.mxu0 0.0
    %v1358 = vand.u32 %v52, 4294901760
    %v1359 = vsub.f32 %v52, %v1358
    %v1360 = vand.u32 %v1359, 4294901760
    %v1361 = vsub.f32 %v1359, %v1360
    %v1362 = vand.u32 %v1361, 4294901760
    %1363 = vmatpush1.msra.mxu0 %v1362
    %1364 = vmatprep.subr.mxu0 0.0
    %v1365 = vand.u32 %v51, 4294901760
    %v1366 = vsub.f32 %v51, %v1365
    %v1367 = vand.u32 %v1366, 4294901760
    %v1368 = vsub.f32 %v1366, %v1367
    %v1369 = vand.u32 %v1368, 4294901760
    %1370 = vmatpush1.msra.mxu0 %v1369
    %1371 = vmatprep.subr.mxu0 0.0
    %v1372 = vand.u32 %v50, 4294901760
    %v1373 = vsub.f32 %v50, %v1372
    %v1374 = vand.u32 %v1373, 4294901760
    %v1375 = vsub.f32 %v1373, %v1374
    %v1376 = vand.u32 %v1375, 4294901760
    %1377 = vmatpush1.msra.mxu0 %v1376
    %1378 = vmatprep.subr.mxu0 0.0
    %v1379 = vand.u32 %v49, 4294901760
    %v1380 = vsub.f32 %v49, %v1379
    %v1381 = vand.u32 %v1380, 4294901760
    %v1382 = vsub.f32 %v1380, %v1381
    %v1383 = vand.u32 %v1382, 4294901760
    %1384 = vmatpush1.msra.mxu0 %v1383
    %1385 = vmatprep.subr.mxu0 0.0
    %v1386 = vand.u32 %v48, 4294901760
    %v1387 = vsub.f32 %v48, %v1386
    %v1388 = vand.u32 %v1387, 4294901760
    %v1389 = vsub.f32 %v1387, %v1388
    %v1390 = vand.u32 %v1389, 4294901760
    %1391 = vmatpush1.msra.mxu0 %v1390
    %1392 = vmatprep.subr.mxu0 0.0
    %v1393 = vand.u32 %v47, 4294901760
    %v1394 = vsub.f32 %v47, %v1393
    %v1395 = vand.u32 %v1394, 4294901760
    %v1396 = vsub.f32 %v1394, %v1395
    %v1397 = vand.u32 %v1396, 4294901760
    %1398 = vmatpush1.msra.mxu0 %v1397
    %1399 = vmatprep.subr.mxu0 0.0
    %v1400 = vand.u32 %v46, 4294901760
    %v1401 = vsub.f32 %v46, %v1400
    %v1402 = vand.u32 %v1401, 4294901760
    %v1403 = vsub.f32 %v1401, %v1402
    %v1404 = vand.u32 %v1403, 4294901760
    %1405 = vmatpush1.msra.mxu0 %v1404
    %1406 = vmatprep.subr.mxu0 0.0
    %1407 = vmatpush2.msra.mxu0 0.0
    %1408 = vmatprep.subr.mxu0 0.0
    %1409 = vmatpush2.msra.mxu0 0.0
    %1410 = vmatprep.subr.mxu0 0.0
    %1411 = vmatpush2.msra.mxu0 0.0
    %1412 = vmatprep.subr.mxu0 0.0
    %1413 = vmatpush2.msra.mxu0 0.0
    %1414 = vmatprep.subr.mxu0 0.0
    %1415 = vmatpush2.msra.mxu0 0.0
    %1416 = vmatprep.subr.mxu0 0.0
    %1417 = vmatpush2.msra.mxu0 0.0
    %1418 = vmatprep.subr.mxu0 0.0
    %1419 = vmatpush2.msra.mxu0 0.0
    %1420 = vmatprep.subr.mxu0 0.0
    %1421 = vmatpush2.msra.mxu0 0.0
    %1422 = vmatprep.subr.mxu0 0.0
    %1423 = vmatpush2.msra.mxu0 0.0
    %1424 = vmatprep.subr.mxu0 0.0
    %1425 = vmatpush2.msra.mxu0 0.0
    %1426 = vmatprep.subr.mxu0 0.0
    %1427 = vmatpush2.msra.mxu0 0.0
    %1428 = vmatprep.subr.mxu0 0.0
    %1429 = vmatpush2.msra.mxu0 0.0
    %1430 = vmatprep.subr.mxu0 0.0
    %1431 = vmatpush2.msra.mxu0 0.0
    %1432 = vmatprep.subr.mxu0 0.0
    %1433 = vmatpush2.msra.mxu0 0.0
    %1434 = vmatprep.subr.mxu0 0.0
    %1435 = vmatpush2.msra.mxu0 0.0
    %1436 = vmatprep.subr.mxu0 0.0
    %1437 = vmatpush2.msra.mxu0 0.0
    %1438 = vmatprep.mubr.f32.mxu0 0.0
    %v1439 = vand.u32 %v1198, 4294901760
    %1440 = vmatmul.mubr.f32.gmra.mxu0 %v1439
    %v1441 = vpop.f32.mrf.mxu0
    %v1442 = vadd.f32 %v1291, %v1441
    %v1443 = vpop.f32.mrf.mxu0
    %1444 = vdwg.mxu0
    %1445 = vmatprep.subr.mxu0 0.0
    %v1446 = vand.u32 %v61, 4294901760
    %v1447 = vsub.f32 %v61, %v1446
    %1448 = vmatpush1.msra.mxu0 %v1447
    %1449 = vmatprep.subr.mxu0 0.0
    %v1450 = vand.u32 %v60, 4294901760
    %v1451 = vsub.f32 %v60, %v1450
    %1452 = vmatpush1.msra.mxu0 %v1451
    %1453 = vmatprep.subr.mxu0 0.0
    %v1454 = vand.u32 %v59, 4294901760
    %v1455 = vsub.f32 %v59, %v1454
    %1456 = vmatpush1.msra.mxu0 %v1455
    %1457 = vmatprep.subr.mxu0 0.0
    %v1458 = vand.u32 %v58, 4294901760
    %v1459 = vsub.f32 %v58, %v1458
    %1460 = vmatpush1.msra.mxu0 %v1459
    %1461 = vmatprep.subr.mxu0 0.0
    %v1462 = vand.u32 %v57, 4294901760
    %v1463 = vsub.f32 %v57, %v1462
    %1464 = vmatpush1.msra.mxu0 %v1463
    %1465 = vmatprep.subr.mxu0 0.0
    %v1466 = vand.u32 %v56, 4294901760
    %v1467 = vsub.f32 %v56, %v1466
    %1468 = vmatpush1.msra.mxu0 %v1467
    %1469 = vmatprep.subr.mxu0 0.0
    %v1470 = vand.u32 %v55, 4294901760
    %v1471 = vsub.f32 %v55, %v1470
    %1472 = vmatpush1.msra.mxu0 %v1471
    %1473 = vmatprep.subr.mxu0 0.0
    %v1474 = vand.u32 %v54, 4294901760
    %v1475 = vsub.f32 %v54, %v1474
    %1476 = vmatpush1.msra.mxu0 %v1475
    %1477 = vmatprep.subr.mxu0 0.0
    %v1478 = vand.u32 %v53, 4294901760
    %v1479 = vsub.f32 %v53, %v1478
    %1480 = vmatpush1.msra.mxu0 %v1479
    %1481 = vmatprep.subr.mxu0 0.0
    %v1482 = vand.u32 %v52, 4294901760
    %v1483 = vsub.f32 %v52, %v1482
    %1484 = vmatpush1.msra.mxu0 %v1483
    %1485 = vmatprep.subr.mxu0 0.0
    %v1486 = vand.u32 %v51, 4294901760
    %v1487 = vsub.f32 %v51, %v1486
    %1488 = vmatpush1.msra.mxu0 %v1487
    %1489 = vmatprep.subr.mxu0 0.0
    %v1490 = vand.u32 %v50, 4294901760
    %v1491 = vsub.f32 %v50, %v1490
    %1492 = vmatpush1.msra.mxu0 %v1491
    %1493 = vmatprep.subr.mxu0 0.0
    %v1494 = vand.u32 %v49, 4294901760
    %v1495 = vsub.f32 %v49, %v1494
    %1496 = vmatpush1.msra.mxu0 %v1495
    %1497 = vmatprep.subr.mxu0 0.0
    %v1498 = vand.u32 %v48, 4294901760
    %v1499 = vsub.f32 %v48, %v1498
    %1500 = vmatpush1.msra.mxu0 %v1499
    %1501 = vmatprep.subr.mxu0 0.0
    %v1502 = vand.u32 %v47, 4294901760
    %v1503 = vsub.f32 %v47, %v1502
    %1504 = vmatpush1.msra.mxu0 %v1503
    %1505 = vmatprep.subr.mxu0 0.0
    %v1506 = vand.u32 %v46, 4294901760
    %v1507 = vsub.f32 %v46, %v1506
    %1508 = vmatpush1.msra.mxu0 %v1507
    %1509 = vmatprep.subr.mxu0 0.0
    %1510 = vmatpush2.msra.mxu0 0.0
    %1511 = vmatprep.subr.mxu0 0.0
    %1512 = vmatpush2.msra.mxu0 0.0
    %1513 = vmatprep.subr.mxu0 0.0
    %1514 = vmatpush2.msra.mxu0 0.0
    %1515 = vmatprep.subr.mxu0 0.0
    %1516 = vmatpush2.msra.mxu0 0.0
    %1517 = vmatprep.subr.mxu0 0.0
    %1518 = vmatpush2.msra.mxu0 0.0
    %1519 = vmatprep.subr.mxu0 0.0
    %1520 = vmatpush2.msra.mxu0 0.0
    %1521 = vmatprep.subr.mxu0 0.0
    %1522 = vmatpush2.msra.mxu0 0.0
    %1523 = vmatprep.subr.mxu0 0.0
    %1524 = vmatpush2.msra.mxu0 0.0
    %1525 = vmatprep.subr.mxu0 0.0
    %1526 = vmatpush2.msra.mxu0 0.0
    %1527 = vmatprep.subr.mxu0 0.0
    %1528 = vmatpush2.msra.mxu0 0.0
    %1529 = vmatprep.subr.mxu0 0.0
    %1530 = vmatpush2.msra.mxu0 0.0
    %1531 = vmatprep.subr.mxu0 0.0
    %1532 = vmatpush2.msra.mxu0 0.0
    %1533 = vmatprep.subr.mxu0 0.0
    %1534 = vmatpush2.msra.mxu0 0.0
    %1535 = vmatprep.subr.mxu0 0.0
    %1536 = vmatpush2.msra.mxu0 0.0
    %1537 = vmatprep.subr.mxu0 0.0
    %1538 = vmatpush2.msra.mxu0 0.0
    %1539 = vmatprep.subr.mxu0 0.0
    %1540 = vmatpush2.msra.mxu0 0.0
    %1541 = vmatprep.mubr.f32.mxu0 0.0
    %v1542 = vand.u32 %v1198, 4294901760
    %v1543 = vsub.f32 %v1198, %v1542
    %1544 = vmatmul.mubr.f32.gmra.mxu0 %v1543
    %v1545 = vpop.f32.mrf.mxu0
    %v1546 = vadd.f32 %v1442, %v1545
    %v1547 = vpop.f32.mrf.mxu0
    %1548 = vdwg.mxu0
    %1549 = vmatprep.subr.mxu0 0.0
    %v1550 = vand.u32 %v61, 4294901760
    %1551 = vmatpush1.msra.mxu0 %v1550
    %1552 = vmatprep.subr.mxu0 0.0
    %v1553 = vand.u32 %v60, 4294901760
    %1554 = vmatpush1.msra.mxu0 %v1553
    %1555 = vmatprep.subr.mxu0 0.0
    %v1556 = vand.u32 %v59, 4294901760
    %1557 = vmatpush1.msra.mxu0 %v1556
    %1558 = vmatprep.subr.mxu0 0.0
    %v1559 = vand.u32 %v58, 4294901760
    %1560 = vmatpush1.msra.mxu0 %v1559
    %1561 = vmatprep.subr.mxu0 0.0
    %v1562 = vand.u32 %v57, 4294901760
    %1563 = vmatpush1.msra.mxu0 %v1562
    %1564 = vmatprep.subr.mxu0 0.0
    %v1565 = vand.u32 %v56, 4294901760
    %1566 = vmatpush1.msra.mxu0 %v1565
    %1567 = vmatprep.subr.mxu0 0.0
    %v1568 = vand.u32 %v55, 4294901760
    %1569 = vmatpush1.msra.mxu0 %v1568
    %1570 = vmatprep.subr.mxu0 0.0
    %v1571 = vand.u32 %v54, 4294901760
    %1572 = vmatpush1.msra.mxu0 %v1571
    %1573 = vmatprep.subr.mxu0 0.0
    %v1574 = vand.u32 %v53, 4294901760
    %1575 = vmatpush1.msra.mxu0 %v1574
    %1576 = vmatprep.subr.mxu0 0.0
    %v1577 = vand.u32 %v52, 4294901760
    %1578 = vmatpush1.msra.mxu0 %v1577
    %1579 = vmatprep.subr.mxu0 0.0
    %v1580 = vand.u32 %v51, 4294901760
    %1581 = vmatpush1.msra.mxu0 %v1580
    %1582 = vmatprep.subr.mxu0 0.0
    %v1583 = vand.u32 %v50, 4294901760
    %1584 = vmatpush1.msra.mxu0 %v1583
    %1585 = vmatprep.subr.mxu0 0.0
    %v1586 = vand.u32 %v49, 4294901760
    %1587 = vmatpush1.msra.mxu0 %v1586
    %1588 = vmatprep.subr.mxu0 0.0
    %v1589 = vand.u32 %v48, 4294901760
    %1590 = vmatpush1.msra.mxu0 %v1589
    %1591 = vmatprep.subr.mxu0 0.0
    %v1592 = vand.u32 %v47, 4294901760
    %1593 = vmatpush1.msra.mxu0 %v1592
    %1594 = vmatprep.subr.mxu0 0.0
    %v1595 = vand.u32 %v46, 4294901760
    %1596 = vmatpush1.msra.mxu0 %v1595
    %1597 = vmatprep.subr.mxu0 0.0
    %1598 = vmatpush2.msra.mxu0 0.0
    %1599 = vmatprep.subr.mxu0 0.0
    %1600 = vmatpush2.msra.mxu0 0.0
    %1601 = vmatprep.subr.mxu0 0.0
    %1602 = vmatpush2.msra.mxu0 0.0
    %1603 = vmatprep.subr.mxu0 0.0
    %1604 = vmatpush2.msra.mxu0 0.0
    %1605 = vmatprep.subr.mxu0 0.0
    %1606 = vmatpush2.msra.mxu0 0.0
    %1607 = vmatprep.subr.mxu0 0.0
    %1608 = vmatpush2.msra.mxu0 0.0
    %1609 = vmatprep.subr.mxu0 0.0
    %1610 = vmatpush2.msra.mxu0 0.0
    %1611 = vmatprep.subr.mxu0 0.0
    %1612 = vmatpush2.msra.mxu0 0.0
    %1613 = vmatprep.subr.mxu0 0.0
    %1614 = vmatpush2.msra.mxu0 0.0
    %1615 = vmatprep.subr.mxu0 0.0
    %1616 = vmatpush2.msra.mxu0 0.0
    %1617 = vmatprep.subr.mxu0 0.0
    %1618 = vmatpush2.msra.mxu0 0.0
    %1619 = vmatprep.subr.mxu0 0.0
    %1620 = vmatpush2.msra.mxu0 0.0
    %1621 = vmatprep.subr.mxu0 0.0
    %1622 = vmatpush2.msra.mxu0 0.0
    %1623 = vmatprep.subr.mxu0 0.0
    %1624 = vmatpush2.msra.mxu0 0.0
    %1625 = vmatprep.subr.mxu0 0.0
    %1626 = vmatpush2.msra.mxu0 0.0
    %1627 = vmatprep.subr.mxu0 0.0
    %1628 = vmatpush2.msra.mxu0 0.0
    %1629 = vmatprep.mubr.f32.mxu0 0.0
    %v1630 = vand.u32 %v1198, 4294901760
    %v1631 = vsub.f32 %v1198, %v1630
    %v1632 = vand.u32 %v1631, 4294901760
    %1633 = vmatmul.mubr.f32.gmra.mxu0 %v1632
    %v1634 = vpop.f32.mrf.mxu0
    %v1635 = vadd.f32 %v1546, %v1634
    %v1636 = vpop.f32.mrf.mxu0
    %1637 = vdwg.mxu0
    %1638 = vmatprep.subr.mxu0 0.0
    %v1639 = vand.u32 %v61, 4294901760
    %v1640 = vsub.f32 %v61, %v1639
    %v1641 = vand.u32 %v1640, 4294901760
    %1642 = vmatpush1.msra.mxu0 %v1641
    %1643 = vmatprep.subr.mxu0 0.0
    %v1644 = vand.u32 %v60, 4294901760
    %v1645 = vsub.f32 %v60, %v1644
    %v1646 = vand.u32 %v1645, 4294901760
    %1647 = vmatpush1.msra.mxu0 %v1646
    %1648 = vmatprep.subr.mxu0 0.0
    %v1649 = vand.u32 %v59, 4294901760
    %v1650 = vsub.f32 %v59, %v1649
    %v1651 = vand.u32 %v1650, 4294901760
    %1652 = vmatpush1.msra.mxu0 %v1651
    %1653 = vmatprep.subr.mxu0 0.0
    %v1654 = vand.u32 %v58, 4294901760
    %v1655 = vsub.f32 %v58, %v1654
    %v1656 = vand.u32 %v1655, 4294901760
    %1657 = vmatpush1.msra.mxu0 %v1656
    %1658 = vmatprep.subr.mxu0 0.0
    %v1659 = vand.u32 %v57, 4294901760
    %v1660 = vsub.f32 %v57, %v1659
    %v1661 = vand.u32 %v1660, 4294901760
    %1662 = vmatpush1.msra.mxu0 %v1661
    %1663 = vmatprep.subr.mxu0 0.0
    %v1664 = vand.u32 %v56, 4294901760
    %v1665 = vsub.f32 %v56, %v1664
    %v1666 = vand.u32 %v1665, 4294901760
    %1667 = vmatpush1.msra.mxu0 %v1666
    %1668 = vmatprep.subr.mxu0 0.0
    %v1669 = vand.u32 %v55, 4294901760
    %v1670 = vsub.f32 %v55, %v1669
    %v1671 = vand.u32 %v1670, 4294901760
    %1672 = vmatpush1.msra.mxu0 %v1671
    %1673 = vmatprep.subr.mxu0 0.0
    %v1674 = vand.u32 %v54, 4294901760
    %v1675 = vsub.f32 %v54, %v1674
    %v1676 = vand.u32 %v1675, 4294901760
    %1677 = vmatpush1.msra.mxu0 %v1676
    %1678 = vmatprep.subr.mxu0 0.0
    %v1679 = vand.u32 %v53, 4294901760
    %v1680 = vsub.f32 %v53, %v1679
    %v1681 = vand.u32 %v1680, 4294901760
    %1682 = vmatpush1.msra.mxu0 %v1681
    %1683 = vmatprep.subr.mxu0 0.0
    %v1684 = vand.u32 %v52, 4294901760
    %v1685 = vsub.f32 %v52, %v1684
    %v1686 = vand.u32 %v1685, 4294901760
    %1687 = vmatpush1.msra.mxu0 %v1686
    %1688 = vmatprep.subr.mxu0 0.0
    %v1689 = vand.u32 %v51, 4294901760
    %v1690 = vsub.f32 %v51, %v1689
    %v1691 = vand.u32 %v1690, 4294901760
    %1692 = vmatpush1.msra.mxu0 %v1691
    %1693 = vmatprep.subr.mxu0 0.0
    %v1694 = vand.u32 %v50, 4294901760
    %v1695 = vsub.f32 %v50, %v1694
    %v1696 = vand.u32 %v1695, 4294901760
    %1697 = vmatpush1.msra.mxu0 %v1696
    %1698 = vmatprep.subr.mxu0 0.0
    %v1699 = vand.u32 %v49, 4294901760
    %v1700 = vsub.f32 %v49, %v1699
    %v1701 = vand.u32 %v1700, 4294901760
    %1702 = vmatpush1.msra.mxu0 %v1701
    %1703 = vmatprep.subr.mxu0 0.0
    %v1704 = vand.u32 %v48, 4294901760
    %v1705 = vsub.f32 %v48, %v1704
    %v1706 = vand.u32 %v1705, 4294901760
    %1707 = vmatpush1.msra.mxu0 %v1706
    %1708 = vmatprep.subr.mxu0 0.0
    %v1709 = vand.u32 %v47, 4294901760
    %v1710 = vsub.f32 %v47, %v1709
    %v1711 = vand.u32 %v1710, 4294901760
    %1712 = vmatpush1.msra.mxu0 %v1711
    %1713 = vmatprep.subr.mxu0 0.0
    %v1714 = vand.u32 %v46, 4294901760
    %v1715 = vsub.f32 %v46, %v1714
    %v1716 = vand.u32 %v1715, 4294901760
    %1717 = vmatpush1.msra.mxu0 %v1716
    %1718 = vmatprep.subr.mxu0 0.0
    %1719 = vmatpush2.msra.mxu0 0.0
    %1720 = vmatprep.subr.mxu0 0.0
    %1721 = vmatpush2.msra.mxu0 0.0
    %1722 = vmatprep.subr.mxu0 0.0
    %1723 = vmatpush2.msra.mxu0 0.0
    %1724 = vmatprep.subr.mxu0 0.0
    %1725 = vmatpush2.msra.mxu0 0.0
    %1726 = vmatprep.subr.mxu0 0.0
    %1727 = vmatpush2.msra.mxu0 0.0
    %1728 = vmatprep.subr.mxu0 0.0
    %1729 = vmatpush2.msra.mxu0 0.0
    %1730 = vmatprep.subr.mxu0 0.0
    %1731 = vmatpush2.msra.mxu0 0.0
    %1732 = vmatprep.subr.mxu0 0.0
    %1733 = vmatpush2.msra.mxu0 0.0
    %1734 = vmatprep.subr.mxu0 0.0
    %1735 = vmatpush2.msra.mxu0 0.0
    %1736 = vmatprep.subr.mxu0 0.0
    %1737 = vmatpush2.msra.mxu0 0.0
    %1738 = vmatprep.subr.mxu0 0.0
    %1739 = vmatpush2.msra.mxu0 0.0
    %1740 = vmatprep.subr.mxu0 0.0
    %1741 = vmatpush2.msra.mxu0 0.0
    %1742 = vmatprep.subr.mxu0 0.0
    %1743 = vmatpush2.msra.mxu0 0.0
    %1744 = vmatprep.subr.mxu0 0.0
    %1745 = vmatpush2.msra.mxu0 0.0
    %1746 = vmatprep.subr.mxu0 0.0
    %1747 = vmatpush2.msra.mxu0 0.0
    %1748 = vmatprep.subr.mxu0 0.0
    %1749 = vmatpush2.msra.mxu0 0.0
    %1750 = vmatprep.mubr.f32.mxu0 0.0
    %v1751 = vand.u32 %v1198, 4294901760
    %1752 = vmatmul.mubr.f32.gmra.mxu0 %v1751
    %v1753 = vpop.f32.mrf.mxu0
    %v1754 = vadd.f32 %v1635, %v1753
    %v1755 = vpop.f32.mrf.mxu0
    %1756 = vdwg.mxu0
    %1757 = vmatprep.subr.mxu0 0.0
    %v1758 = vand.u32 %v61, 4294901760
    %1759 = vmatpush1.msra.mxu0 %v1758
    %1760 = vmatprep.subr.mxu0 0.0
    %v1761 = vand.u32 %v60, 4294901760
    %1762 = vmatpush1.msra.mxu0 %v1761
    %1763 = vmatprep.subr.mxu0 0.0
    %v1764 = vand.u32 %v59, 4294901760
    %1765 = vmatpush1.msra.mxu0 %v1764
    %1766 = vmatprep.subr.mxu0 0.0
    %v1767 = vand.u32 %v58, 4294901760
    %1768 = vmatpush1.msra.mxu0 %v1767
    %1769 = vmatprep.subr.mxu0 0.0
    %v1770 = vand.u32 %v57, 4294901760
    %1771 = vmatpush1.msra.mxu0 %v1770
    %1772 = vmatprep.subr.mxu0 0.0
    %v1773 = vand.u32 %v56, 4294901760
    %1774 = vmatpush1.msra.mxu0 %v1773
    %1775 = vmatprep.subr.mxu0 0.0
    %v1776 = vand.u32 %v55, 4294901760
    %1777 = vmatpush1.msra.mxu0 %v1776
    %1778 = vmatprep.subr.mxu0 0.0
    %v1779 = vand.u32 %v54, 4294901760
    %1780 = vmatpush1.msra.mxu0 %v1779
    %1781 = vmatprep.subr.mxu0 0.0
    %v1782 = vand.u32 %v53, 4294901760
    %1783 = vmatpush1.msra.mxu0 %v1782
    %1784 = vmatprep.subr.mxu0 0.0
    %v1785 = vand.u32 %v52, 4294901760
    %1786 = vmatpush1.msra.mxu0 %v1785
    %1787 = vmatprep.subr.mxu0 0.0
    %v1788 = vand.u32 %v51, 4294901760
    %1789 = vmatpush1.msra.mxu0 %v1788
    %1790 = vmatprep.subr.mxu0 0.0
    %v1791 = vand.u32 %v50, 4294901760
    %1792 = vmatpush1.msra.mxu0 %v1791
    %1793 = vmatprep.subr.mxu0 0.0
    %v1794 = vand.u32 %v49, 4294901760
    %1795 = vmatpush1.msra.mxu0 %v1794
    %1796 = vmatprep.subr.mxu0 0.0
    %v1797 = vand.u32 %v48, 4294901760
    %1798 = vmatpush1.msra.mxu0 %v1797
    %1799 = vmatprep.subr.mxu0 0.0
    %v1800 = vand.u32 %v47, 4294901760
    %1801 = vmatpush1.msra.mxu0 %v1800
    %1802 = vmatprep.subr.mxu0 0.0
    %v1803 = vand.u32 %v46, 4294901760
    %1804 = vmatpush1.msra.mxu0 %v1803
    %1805 = vmatprep.subr.mxu0 0.0
    %1806 = vmatpush2.msra.mxu0 0.0
    %1807 = vmatprep.subr.mxu0 0.0
    %1808 = vmatpush2.msra.mxu0 0.0
    %1809 = vmatprep.subr.mxu0 0.0
    %1810 = vmatpush2.msra.mxu0 0.0
    %1811 = vmatprep.subr.mxu0 0.0
    %1812 = vmatpush2.msra.mxu0 0.0
    %1813 = vmatprep.subr.mxu0 0.0
    %1814 = vmatpush2.msra.mxu0 0.0
    %1815 = vmatprep.subr.mxu0 0.0
    %1816 = vmatpush2.msra.mxu0 0.0
    %1817 = vmatprep.subr.mxu0 0.0
    %1818 = vmatpush2.msra.mxu0 0.0
    %1819 = vmatprep.subr.mxu0 0.0
    %1820 = vmatpush2.msra.mxu0 0.0
    %1821 = vmatprep.subr.mxu0 0.0
    %1822 = vmatpush2.msra.mxu0 0.0
    %1823 = vmatprep.subr.mxu0 0.0
    %1824 = vmatpush2.msra.mxu0 0.0
    %1825 = vmatprep.subr.mxu0 0.0
    %1826 = vmatpush2.msra.mxu0 0.0
    %1827 = vmatprep.subr.mxu0 0.0
    %1828 = vmatpush2.msra.mxu0 0.0
    %1829 = vmatprep.subr.mxu0 0.0
    %1830 = vmatpush2.msra.mxu0 0.0
    %1831 = vmatprep.subr.mxu0 0.0
    %1832 = vmatpush2.msra.mxu0 0.0
    %1833 = vmatprep.subr.mxu0 0.0
    %1834 = vmatpush2.msra.mxu0 0.0
    %1835 = vmatprep.subr.mxu0 0.0
    %1836 = vmatpush2.msra.mxu0 0.0
    %1837 = vmatprep.mubr.f32.mxu0 0.0
    %v1838 = vand.u32 %v1198, 4294901760
    %1839 = vmatmul.mubr.f32.gmra.mxu0 %v1838
    %v1840 = vpop.f32.mrf.mxu0
    %v1841 = vadd.f32 %v1754, %v1840
    %v1842 = vpop.f32.mrf.mxu0
    %1843 = vdwg.mxu0
    %v1844 = vmax.f32 %v1841, 0.0
    %v1845 = vlaneseq
    %v1846 = vshrl.u32 %v1845, 7
    %v1847 = vsub.s32 0, %v1846
    %v1848 = vrot.slane %v81, %v1847
    %1849 = vmatprep.subr.mxu0 0.0
    %v1850 = vand.u32 %v77, 4294901760
    %1851 = vmatpush1.msra.mxu0 %v1850
    %1852 = vmatprep.subr.mxu0 0.0
    %v1853 = vand.u32 %v76, 4294901760
    %1854 = vmatpush1.msra.mxu0 %v1853
    %1855 = vmatprep.subr.mxu0 0.0
    %v1856 = vand.u32 %v75, 4294901760
    %1857 = vmatpush1.msra.mxu0 %v1856
    %1858 = vmatprep.subr.mxu0 0.0
    %v1859 = vand.u32 %v74, 4294901760
    %1860 = vmatpush1.msra.mxu0 %v1859
    %1861 = vmatprep.subr.mxu0 0.0
    %v1862 = vand.u32 %v73, 4294901760
    %1863 = vmatpush1.msra.mxu0 %v1862
    %1864 = vmatprep.subr.mxu0 0.0
    %v1865 = vand.u32 %v72, 4294901760
    %1866 = vmatpush1.msra.mxu0 %v1865
    %1867 = vmatprep.subr.mxu0 0.0
    %v1868 = vand.u32 %v71, 4294901760
    %1869 = vmatpush1.msra.mxu0 %v1868
    %1870 = vmatprep.subr.mxu0 0.0
    %v1871 = vand.u32 %v70, 4294901760
    %1872 = vmatpush1.msra.mxu0 %v1871
    %1873 = vmatprep.subr.mxu0 0.0
    %v1874 = vand.u32 %v69, 4294901760
    %1875 = vmatpush1.msra.mxu0 %v1874
    %1876 = vmatprep.subr.mxu0 0.0
    %v1877 = vand.u32 %v68, 4294901760
    %1878 = vmatpush1.msra.mxu0 %v1877
    %1879 = vmatprep.subr.mxu0 0.0
    %v1880 = vand.u32 %v67, 4294901760
    %1881 = vmatpush1.msra.mxu0 %v1880
    %1882 = vmatprep.subr.mxu0 0.0
    %v1883 = vand.u32 %v66, 4294901760
    %1884 = vmatpush1.msra.mxu0 %v1883
    %1885 = vmatprep.subr.mxu0 0.0
    %v1886 = vand.u32 %v65, 4294901760
    %1887 = vmatpush1.msra.mxu0 %v1886
    %1888 = vmatprep.subr.mxu0 0.0
    %v1889 = vand.u32 %v64, 4294901760
    %1890 = vmatpush1.msra.mxu0 %v1889
    %1891 = vmatprep.subr.mxu0 0.0
    %v1892 = vand.u32 %v63, 4294901760
    %1893 = vmatpush1.msra.mxu0 %v1892
    %1894 = vmatprep.subr.mxu0 0.0
    %v1895 = vand.u32 %v62, 4294901760
    %1896 = vmatpush1.msra.mxu0 %v1895
    %1897 = vmatprep.subr.mxu0 0.0
    %1898 = vmatpush2.msra.mxu0 0.0
    %1899 = vmatprep.subr.mxu0 0.0
    %1900 = vmatpush2.msra.mxu0 0.0
    %1901 = vmatprep.subr.mxu0 0.0
    %1902 = vmatpush2.msra.mxu0 0.0
    %1903 = vmatprep.subr.mxu0 0.0
    %1904 = vmatpush2.msra.mxu0 0.0
    %1905 = vmatprep.subr.mxu0 0.0
    %1906 = vmatpush2.msra.mxu0 0.0
    %1907 = vmatprep.subr.mxu0 0.0
    %1908 = vmatpush2.msra.mxu0 0.0
    %1909 = vmatprep.subr.mxu0 0.0
    %1910 = vmatpush2.msra.mxu0 0.0
    %1911 = vmatprep.subr.mxu0 0.0
    %1912 = vmatpush2.msra.mxu0 0.0
    %1913 = vmatprep.subr.mxu0 0.0
    %1914 = vmatpush2.msra.mxu0 0.0
    %1915 = vmatprep.subr.mxu0 0.0
    %1916 = vmatpush2.msra.mxu0 0.0
    %1917 = vmatprep.subr.mxu0 0.0
    %1918 = vmatpush2.msra.mxu0 0.0
    %1919 = vmatprep.subr.mxu0 0.0
    %1920 = vmatpush2.msra.mxu0 0.0
    %1921 = vmatprep.subr.mxu0 0.0
    %1922 = vmatpush2.msra.mxu0 0.0
    %1923 = vmatprep.subr.mxu0 0.0
    %1924 = vmatpush2.msra.mxu0 0.0
    %1925 = vmatprep.subr.mxu0 0.0
    %1926 = vmatpush2.msra.mxu0 0.0
    %1927 = vmatprep.subr.mxu0 0.0
    %1928 = vmatpush2.msra.mxu0 0.0
    %1929 = vmatprep.mubr.f32.mxu0 0.0
    %v1930 = vand.u32 %v1844, 4294901760
    %v1931 = vsub.f32 %v1844, %v1930
    %v1932 = vand.u32 %v1931, 4294901760
    %v1933 = vsub.f32 %v1931, %v1932
    %v1934 = vand.u32 %v1933, 4294901760
    %1935 = vmatmul.mubr.f32.gmra.mxu0 %v1934
    %v1936 = vpop.f32.mrf.mxu0
    %v1937 = vadd.f32 %v1848, %v1936
    %v1938 = vpop.f32.mrf.mxu0
    %1939 = vdwg.mxu0
    %1940 = vmatprep.subr.mxu0 0.0
    %v1941 = vand.u32 %v77, 4294901760
    %v1942 = vsub.f32 %v77, %v1941
    %v1943 = vand.u32 %v1942, 4294901760
    %v1944 = vsub.f32 %v1942, %v1943
    %v1945 = vand.u32 %v1944, 4294901760
    %1946 = vmatpush1.msra.mxu0 %v1945
    %1947 = vmatprep.subr.mxu0 0.0
    %v1948 = vand.u32 %v76, 4294901760
    %v1949 = vsub.f32 %v76, %v1948
    %v1950 = vand.u32 %v1949, 4294901760
    %v1951 = vsub.f32 %v1949, %v1950
    %v1952 = vand.u32 %v1951, 4294901760
    %1953 = vmatpush1.msra.mxu0 %v1952
    %1954 = vmatprep.subr.mxu0 0.0
    %v1955 = vand.u32 %v75, 4294901760
    %v1956 = vsub.f32 %v75, %v1955
    %v1957 = vand.u32 %v1956, 4294901760
    %v1958 = vsub.f32 %v1956, %v1957
    %v1959 = vand.u32 %v1958, 4294901760
    %1960 = vmatpush1.msra.mxu0 %v1959
    %1961 = vmatprep.subr.mxu0 0.0
    %v1962 = vand.u32 %v74, 4294901760
    %v1963 = vsub.f32 %v74, %v1962
    %v1964 = vand.u32 %v1963, 4294901760
    %v1965 = vsub.f32 %v1963, %v1964
    %v1966 = vand.u32 %v1965, 4294901760
    %1967 = vmatpush1.msra.mxu0 %v1966
    %1968 = vmatprep.subr.mxu0 0.0
    %v1969 = vand.u32 %v73, 4294901760
    %v1970 = vsub.f32 %v73, %v1969
    %v1971 = vand.u32 %v1970, 4294901760
    %v1972 = vsub.f32 %v1970, %v1971
    %v1973 = vand.u32 %v1972, 4294901760
    %1974 = vmatpush1.msra.mxu0 %v1973
    %1975 = vmatprep.subr.mxu0 0.0
    %v1976 = vand.u32 %v72, 4294901760
    %v1977 = vsub.f32 %v72, %v1976
    %v1978 = vand.u32 %v1977, 4294901760
    %v1979 = vsub.f32 %v1977, %v1978
    %v1980 = vand.u32 %v1979, 4294901760
    %1981 = vmatpush1.msra.mxu0 %v1980
    %1982 = vmatprep.subr.mxu0 0.0
    %v1983 = vand.u32 %v71, 4294901760
    %v1984 = vsub.f32 %v71, %v1983
    %v1985 = vand.u32 %v1984, 4294901760
    %v1986 = vsub.f32 %v1984, %v1985
    %v1987 = vand.u32 %v1986, 4294901760
    %1988 = vmatpush1.msra.mxu0 %v1987
    %1989 = vmatprep.subr.mxu0 0.0
    %v1990 = vand.u32 %v70, 4294901760
    %v1991 = vsub.f32 %v70, %v1990
    %v1992 = vand.u32 %v1991, 4294901760
    %v1993 = vsub.f32 %v1991, %v1992
    %v1994 = vand.u32 %v1993, 4294901760
    %1995 = vmatpush1.msra.mxu0 %v1994
    %1996 = vmatprep.subr.mxu0 0.0
    %v1997 = vand.u32 %v69, 4294901760
    %v1998 = vsub.f32 %v69, %v1997
    %v1999 = vand.u32 %v1998, 4294901760
    %v2000 = vsub.f32 %v1998, %v1999
    %v2001 = vand.u32 %v2000, 4294901760
    %2002 = vmatpush1.msra.mxu0 %v2001
    %2003 = vmatprep.subr.mxu0 0.0
    %v2004 = vand.u32 %v68, 4294901760
    %v2005 = vsub.f32 %v68, %v2004
    %v2006 = vand.u32 %v2005, 4294901760
    %v2007 = vsub.f32 %v2005, %v2006
    %v2008 = vand.u32 %v2007, 4294901760
    %2009 = vmatpush1.msra.mxu0 %v2008
    %2010 = vmatprep.subr.mxu0 0.0
    %v2011 = vand.u32 %v67, 4294901760
    %v2012 = vsub.f32 %v67, %v2011
    %v2013 = vand.u32 %v2012, 4294901760
    %v2014 = vsub.f32 %v2012, %v2013
    %v2015 = vand.u32 %v2014, 4294901760
    %2016 = vmatpush1.msra.mxu0 %v2015
    %2017 = vmatprep.subr.mxu0 0.0
    %v2018 = vand.u32 %v66, 4294901760
    %v2019 = vsub.f32 %v66, %v2018
    %v2020 = vand.u32 %v2019, 4294901760
    %v2021 = vsub.f32 %v2019, %v2020
    %v2022 = vand.u32 %v2021, 4294901760
    %2023 = vmatpush1.msra.mxu0 %v2022
    %2024 = vmatprep.subr.mxu0 0.0
    %v2025 = vand.u32 %v65, 4294901760
    %v2026 = vsub.f32 %v65, %v2025
    %v2027 = vand.u32 %v2026, 4294901760
    %v2028 = vsub.f32 %v2026, %v2027
    %v2029 = vand.u32 %v2028, 4294901760
    %2030 = vmatpush1.msra.mxu0 %v2029
    %2031 = vmatprep.subr.mxu0 0.0
    %v2032 = vand.u32 %v64, 4294901760
    %v2033 = vsub.f32 %v64, %v2032
    %v2034 = vand.u32 %v2033, 4294901760
    %v2035 = vsub.f32 %v2033, %v2034
    %v2036 = vand.u32 %v2035, 4294901760
    %2037 = vmatpush1.msra.mxu0 %v2036
    %2038 = vmatprep.subr.mxu0 0.0
    %v2039 = vand.u32 %v63, 4294901760
    %v2040 = vsub.f32 %v63, %v2039
    %v2041 = vand.u32 %v2040, 4294901760
    %v2042 = vsub.f32 %v2040, %v2041
    %v2043 = vand.u32 %v2042, 4294901760
    %2044 = vmatpush1.msra.mxu0 %v2043
    %2045 = vmatprep.subr.mxu0 0.0
    %v2046 = vand.u32 %v62, 4294901760
    %v2047 = vsub.f32 %v62, %v2046
    %v2048 = vand.u32 %v2047, 4294901760
    %v2049 = vsub.f32 %v2047, %v2048
    %v2050 = vand.u32 %v2049, 4294901760
    %2051 = vmatpush1.msra.mxu0 %v2050
    %2052 = vmatprep.subr.mxu0 0.0
    %2053 = vmatpush2.msra.mxu0 0.0
    %2054 = vmatprep.subr.mxu0 0.0
    %2055 = vmatpush2.msra.mxu0 0.0
    %2056 = vmatprep.subr.mxu0 0.0
    %2057 = vmatpush2.msra.mxu0 0.0
    %2058 = vmatprep.subr.mxu0 0.0
    %2059 = vmatpush2.msra.mxu0 0.0
    %2060 = vmatprep.subr.mxu0 0.0
    %2061 = vmatpush2.msra.mxu0 0.0
    %2062 = vmatprep.subr.mxu0 0.0
    %2063 = vmatpush2.msra.mxu0 0.0
    %2064 = vmatprep.subr.mxu0 0.0
    %2065 = vmatpush2.msra.mxu0 0.0
    %2066 = vmatprep.subr.mxu0 0.0
    %2067 = vmatpush2.msra.mxu0 0.0
    %2068 = vmatprep.subr.mxu0 0.0
    %2069 = vmatpush2.msra.mxu0 0.0
    %2070 = vmatprep.subr.mxu0 0.0
    %2071 = vmatpush2.msra.mxu0 0.0
    %2072 = vmatprep.subr.mxu0 0.0
    %2073 = vmatpush2.msra.mxu0 0.0
    %2074 = vmatprep.subr.mxu0 0.0
    %2075 = vmatpush2.msra.mxu0 0.0
    %2076 = vmatprep.subr.mxu0 0.0
    %2077 = vmatpush2.msra.mxu0 0.0
    %2078 = vmatprep.subr.mxu0 0.0
    %2079 = vmatpush2.msra.mxu0 0.0
    %2080 = vmatprep.subr.mxu0 0.0
    %2081 = vmatpush2.msra.mxu0 0.0
    %2082 = vmatprep.subr.mxu0 0.0
    %2083 = vmatpush2.msra.mxu0 0.0
    %2084 = vmatprep.mubr.f32.mxu0 0.0
    %v2085 = vand.u32 %v1844, 4294901760
    %2086 = vmatmul.mubr.f32.gmra.mxu0 %v2085
    %v2087 = vpop.f32.mrf.mxu0
    %v2088 = vadd.f32 %v1937, %v2087
    %v2089 = vpop.f32.mrf.mxu0
    %2090 = vdwg.mxu0
    %2091 = vmatprep.subr.mxu0 0.0
    %v2092 = vand.u32 %v77, 4294901760
    %v2093 = vsub.f32 %v77, %v2092
    %2094 = vmatpush1.msra.mxu0 %v2093
    %2095 = vmatprep.subr.mxu0 0.0
    %v2096 = vand.u32 %v76, 4294901760
    %v2097 = vsub.f32 %v76, %v2096
    %2098 = vmatpush1.msra.mxu0 %v2097
    %2099 = vmatprep.subr.mxu0 0.0
    %v2100 = vand.u32 %v75, 4294901760
    %v2101 = vsub.f32 %v75, %v2100
    %2102 = vmatpush1.msra.mxu0 %v2101
    %2103 = vmatprep.subr.mxu0 0.0
    %v2104 = vand.u32 %v74, 4294901760
    %v2105 = vsub.f32 %v74, %v2104
    %2106 = vmatpush1.msra.mxu0 %v2105
    %2107 = vmatprep.subr.mxu0 0.0
    %v2108 = vand.u32 %v73, 4294901760
    %v2109 = vsub.f32 %v73, %v2108
    %2110 = vmatpush1.msra.mxu0 %v2109
    %2111 = vmatprep.subr.mxu0 0.0
    %v2112 = vand.u32 %v72, 4294901760
    %v2113 = vsub.f32 %v72, %v2112
    %2114 = vmatpush1.msra.mxu0 %v2113
    %2115 = vmatprep.subr.mxu0 0.0
    %v2116 = vand.u32 %v71, 4294901760
    %v2117 = vsub.f32 %v71, %v2116
    %2118 = vmatpush1.msra.mxu0 %v2117
    %2119 = vmatprep.subr.mxu0 0.0
    %v2120 = vand.u32 %v70, 4294901760
    %v2121 = vsub.f32 %v70, %v2120
    %2122 = vmatpush1.msra.mxu0 %v2121
    %2123 = vmatprep.subr.mxu0 0.0
    %v2124 = vand.u32 %v69, 4294901760
    %v2125 = vsub.f32 %v69, %v2124
    %2126 = vmatpush1.msra.mxu0 %v2125
    %2127 = vmatprep.subr.mxu0 0.0
    %v2128 = vand.u32 %v68, 4294901760
    %v2129 = vsub.f32 %v68, %v2128
    %2130 = vmatpush1.msra.mxu0 %v2129
    %2131 = vmatprep.subr.mxu0 0.0
    %v2132 = vand.u32 %v67, 4294901760
    %v2133 = vsub.f32 %v67, %v2132
    %2134 = vmatpush1.msra.mxu0 %v2133
    %2135 = vmatprep.subr.mxu0 0.0
    %v2136 = vand.u32 %v66, 4294901760
    %v2137 = vsub.f32 %v66, %v2136
    %2138 = vmatpush1.msra.mxu0 %v2137
    %2139 = vmatprep.subr.mxu0 0.0
    %v2140 = vand.u32 %v65, 4294901760
    %v2141 = vsub.f32 %v65, %v2140
    %2142 = vmatpush1.msra.mxu0 %v2141
    %2143 = vmatprep.subr.mxu0 0.0
    %v2144 = vand.u32 %v64, 4294901760
    %v2145 = vsub.f32 %v64, %v2144
    %2146 = vmatpush1.msra.mxu0 %v2145
    %2147 = vmatprep.subr.mxu0 0.0
    %v2148 = vand.u32 %v63, 4294901760
    %v2149 = vsub.f32 %v63, %v2148
    %2150 = vmatpush1.msra.mxu0 %v2149
    %2151 = vmatprep.subr.mxu0 0.0
    %v2152 = vand.u32 %v62, 4294901760
    %v2153 = vsub.f32 %v62, %v2152
    %2154 = vmatpush1.msra.mxu0 %v2153
    %2155 = vmatprep.subr.mxu0 0.0
    %2156 = vmatpush2.msra.mxu0 0.0
    %2157 = vmatprep.subr.mxu0 0.0
    %2158 = vmatpush2.msra.mxu0 0.0
    %2159 = vmatprep.subr.mxu0 0.0
    %2160 = vmatpush2.msra.mxu0 0.0
    %2161 = vmatprep.subr.mxu0 0.0
    %2162 = vmatpush2.msra.mxu0 0.0
    %2163 = vmatprep.subr.mxu0 0.0
    %2164 = vmatpush2.msra.mxu0 0.0
    %2165 = vmatprep.subr.mxu0 0.0
    %2166 = vmatpush2.msra.mxu0 0.0
    %2167 = vmatprep.subr.mxu0 0.0
    %2168 = vmatpush2.msra.mxu0 0.0
    %2169 = vmatprep.subr.mxu0 0.0
    %2170 = vmatpush2.msra.mxu0 0.0
    %2171 = vmatprep.subr.mxu0 0.0
    %2172 = vmatpush2.msra.mxu0 0.0
    %2173 = vmatprep.subr.mxu0 0.0
    %2174 = vmatpush2.msra.mxu0 0.0
    %2175 = vmatprep.subr.mxu0 0.0
    %2176 = vmatpush2.msra.mxu0 0.0
    %2177 = vmatprep.subr.mxu0 0.0
    %2178 = vmatpush2.msra.mxu0 0.0
    %2179 = vmatprep.subr.mxu0 0.0
    %2180 = vmatpush2.msra.mxu0 0.0
    %2181 = vmatprep.subr.mxu0 0.0
    %2182 = vmatpush2.msra.mxu0 0.0
    %2183 = vmatprep.subr.mxu0 0.0
    %2184 = vmatpush2.msra.mxu0 0.0
    %2185 = vmatprep.subr.mxu0 0.0
    %2186 = vmatpush2.msra.mxu0 0.0
    %2187 = vmatprep.mubr.f32.mxu0 0.0
    %v2188 = vand.u32 %v1844, 4294901760
    %v2189 = vsub.f32 %v1844, %v2188
    %2190 = vmatmul.mubr.f32.gmra.mxu0 %v2189
    %v2191 = vpop.f32.mrf.mxu0
    %v2192 = vadd.f32 %v2088, %v2191
    %v2193 = vpop.f32.mrf.mxu0
    %2194 = vdwg.mxu0
    %2195 = vmatprep.subr.mxu0 0.0
    %v2196 = vand.u32 %v77, 4294901760
    %2197 = vmatpush1.msra.mxu0 %v2196
    %2198 = vmatprep.subr.mxu0 0.0
    %v2199 = vand.u32 %v76, 4294901760
    %2200 = vmatpush1.msra.mxu0 %v2199
    %2201 = vmatprep.subr.mxu0 0.0
    %v2202 = vand.u32 %v75, 4294901760
    %2203 = vmatpush1.msra.mxu0 %v2202
    %2204 = vmatprep.subr.mxu0 0.0
    %v2205 = vand.u32 %v74, 4294901760
    %2206 = vmatpush1.msra.mxu0 %v2205
    %2207 = vmatprep.subr.mxu0 0.0
    %v2208 = vand.u32 %v73, 4294901760
    %2209 = vmatpush1.msra.mxu0 %v2208
    %2210 = vmatprep.subr.mxu0 0.0
    %v2211 = vand.u32 %v72, 4294901760
    %2212 = vmatpush1.msra.mxu0 %v2211
    %2213 = vmatprep.subr.mxu0 0.0
    %v2214 = vand.u32 %v71, 4294901760
    %2215 = vmatpush1.msra.mxu0 %v2214
    %2216 = vmatprep.subr.mxu0 0.0
    %v2217 = vand.u32 %v70, 4294901760
    %2218 = vmatpush1.msra.mxu0 %v2217
    %2219 = vmatprep.subr.mxu0 0.0
    %v2220 = vand.u32 %v69, 4294901760
    %2221 = vmatpush1.msra.mxu0 %v2220
    %2222 = vmatprep.subr.mxu0 0.0
    %v2223 = vand.u32 %v68, 4294901760
    %2224 = vmatpush1.msra.mxu0 %v2223
    %2225 = vmatprep.subr.mxu0 0.0
    %v2226 = vand.u32 %v67, 4294901760
    %2227 = vmatpush1.msra.mxu0 %v2226
    %2228 = vmatprep.subr.mxu0 0.0
    %v2229 = vand.u32 %v66, 4294901760
    %2230 = vmatpush1.msra.mxu0 %v2229
    %2231 = vmatprep.subr.mxu0 0.0
    %v2232 = vand.u32 %v65, 4294901760
    %2233 = vmatpush1.msra.mxu0 %v2232
    %2234 = vmatprep.subr.mxu0 0.0
    %v2235 = vand.u32 %v64, 4294901760
    %2236 = vmatpush1.msra.mxu0 %v2235
    %2237 = vmatprep.subr.mxu0 0.0
    %v2238 = vand.u32 %v63, 4294901760
    %2239 = vmatpush1.msra.mxu0 %v2238
    %2240 = vmatprep.subr.mxu0 0.0
    %v2241 = vand.u32 %v62, 4294901760
    %2242 = vmatpush1.msra.mxu0 %v2241
    %2243 = vmatprep.subr.mxu0 0.0
    %2244 = vmatpush2.msra.mxu0 0.0
    %2245 = vmatprep.subr.mxu0 0.0
    %2246 = vmatpush2.msra.mxu0 0.0
    %2247 = vmatprep.subr.mxu0 0.0
    %2248 = vmatpush2.msra.mxu0 0.0
    %2249 = vmatprep.subr.mxu0 0.0
    %2250 = vmatpush2.msra.mxu0 0.0
    %2251 = vmatprep.subr.mxu0 0.0
    %2252 = vmatpush2.msra.mxu0 0.0
    %2253 = vmatprep.subr.mxu0 0.0
    %2254 = vmatpush2.msra.mxu0 0.0
    %2255 = vmatprep.subr.mxu0 0.0
    %2256 = vmatpush2.msra.mxu0 0.0
    %2257 = vmatprep.subr.mxu0 0.0
    %2258 = vmatpush2.msra.mxu0 0.0
    %2259 = vmatprep.subr.mxu0 0.0
    %2260 = vmatpush2.msra.mxu0 0.0
    %2261 = vmatprep.subr.mxu0 0.0
    %2262 = vmatpush2.msra.mxu0 0.0
    %2263 = vmatprep.subr.mxu0 0.0
    %2264 = vmatpush2.msra.mxu0 0.0
    %2265 = vmatprep.subr.mxu0 0.0
    %2266 = vmatpush2.msra.mxu0 0.0
    %2267 = vmatprep.subr.mxu0 0.0
    %2268 = vmatpush2.msra.mxu0 0.0
    %2269 = vmatprep.subr.mxu0 0.0
    %2270 = vmatpush2.msra.mxu0 0.0
    %2271 = vmatprep.subr.mxu0 0.0
    %2272 = vmatpush2.msra.mxu0 0.0
    %2273 = vmatprep.subr.mxu0 0.0
    %2274 = vmatpush2.msra.mxu0 0.0
    %2275 = vmatprep.mubr.f32.mxu0 0.0
    %v2276 = vand.u32 %v1844, 4294901760
    %v2277 = vsub.f32 %v1844, %v2276
    %v2278 = vand.u32 %v2277, 4294901760
    %2279 = vmatmul.mubr.f32.gmra.mxu0 %v2278
    %v2280 = vpop.f32.mrf.mxu0
    %v2281 = vadd.f32 %v2192, %v2280
    %v2282 = vpop.f32.mrf.mxu0
    %2283 = vdwg.mxu0
    %2284 = vmatprep.subr.mxu0 0.0
    %v2285 = vand.u32 %v77, 4294901760
    %v2286 = vsub.f32 %v77, %v2285
    %v2287 = vand.u32 %v2286, 4294901760
    %2288 = vmatpush1.msra.mxu0 %v2287
    %2289 = vmatprep.subr.mxu0 0.0
    %v2290 = vand.u32 %v76, 4294901760
    %v2291 = vsub.f32 %v76, %v2290
    %v2292 = vand.u32 %v2291, 4294901760
    %2293 = vmatpush1.msra.mxu0 %v2292
    %2294 = vmatprep.subr.mxu0 0.0
    %v2295 = vand.u32 %v75, 4294901760
    %v2296 = vsub.f32 %v75, %v2295
    %v2297 = vand.u32 %v2296, 4294901760
    %2298 = vmatpush1.msra.mxu0 %v2297
    %2299 = vmatprep.subr.mxu0 0.0
    %v2300 = vand.u32 %v74, 4294901760
    %v2301 = vsub.f32 %v74, %v2300
    %v2302 = vand.u32 %v2301, 4294901760
    %2303 = vmatpush1.msra.mxu0 %v2302
    %2304 = vmatprep.subr.mxu0 0.0
    %v2305 = vand.u32 %v73, 4294901760
    %v2306 = vsub.f32 %v73, %v2305
    %v2307 = vand.u32 %v2306, 4294901760
    %2308 = vmatpush1.msra.mxu0 %v2307
    %2309 = vmatprep.subr.mxu0 0.0
    %v2310 = vand.u32 %v72, 4294901760
    %v2311 = vsub.f32 %v72, %v2310
    %v2312 = vand.u32 %v2311, 4294901760
    %2313 = vmatpush1.msra.mxu0 %v2312
    %2314 = vmatprep.subr.mxu0 0.0
    %v2315 = vand.u32 %v71, 4294901760
    %v2316 = vsub.f32 %v71, %v2315
    %v2317 = vand.u32 %v2316, 4294901760
    %2318 = vmatpush1.msra.mxu0 %v2317
    %2319 = vmatprep.subr.mxu0 0.0
    %v2320 = vand.u32 %v70, 4294901760
    %v2321 = vsub.f32 %v70, %v2320
    %v2322 = vand.u32 %v2321, 4294901760
    %2323 = vmatpush1.msra.mxu0 %v2322
    %2324 = vmatprep.subr.mxu0 0.0
    %v2325 = vand.u32 %v69, 4294901760
    %v2326 = vsub.f32 %v69, %v2325
    %v2327 = vand.u32 %v2326, 4294901760
    %2328 = vmatpush1.msra.mxu0 %v2327
    %2329 = vmatprep.subr.mxu0 0.0
    %v2330 = vand.u32 %v68, 4294901760
    %v2331 = vsub.f32 %v68, %v2330
    %v2332 = vand.u32 %v2331, 4294901760
    %2333 = vmatpush1.msra.mxu0 %v2332
    %2334 = vmatprep.subr.mxu0 0.0
    %v2335 = vand.u32 %v67, 4294901760
    %v2336 = vsub.f32 %v67, %v2335
    %v2337 = vand.u32 %v2336, 4294901760
    %2338 = vmatpush1.msra.mxu0 %v2337
    %2339 = vmatprep.subr.mxu0 0.0
    %v2340 = vand.u32 %v66, 4294901760
    %v2341 = vsub.f32 %v66, %v2340
    %v2342 = vand.u32 %v2341, 4294901760
    %2343 = vmatpush1.msra.mxu0 %v2342
    %2344 = vmatprep.subr.mxu0 0.0
    %v2345 = vand.u32 %v65, 4294901760
    %v2346 = vsub.f32 %v65, %v2345
    %v2347 = vand.u32 %v2346, 4294901760
    %2348 = vmatpush1.msra.mxu0 %v2347
    %2349 = vmatprep.subr.mxu0 0.0
    %v2350 = vand.u32 %v64, 4294901760
    %v2351 = vsub.f32 %v64, %v2350
    %v2352 = vand.u32 %v2351, 4294901760
    %2353 = vmatpush1.msra.mxu0 %v2352
    %2354 = vmatprep.subr.mxu0 0.0
    %v2355 = vand.u32 %v63, 4294901760
    %v2356 = vsub.f32 %v63, %v2355
    %v2357 = vand.u32 %v2356, 4294901760
    %2358 = vmatpush1.msra.mxu0 %v2357
    %2359 = vmatprep.subr.mxu0 0.0
    %v2360 = vand.u32 %v62, 4294901760
    %v2361 = vsub.f32 %v62, %v2360
    %v2362 = vand.u32 %v2361, 4294901760
    %2363 = vmatpush1.msra.mxu0 %v2362
    %2364 = vmatprep.subr.mxu0 0.0
    %2365 = vmatpush2.msra.mxu0 0.0
    %2366 = vmatprep.subr.mxu0 0.0
    %2367 = vmatpush2.msra.mxu0 0.0
    %2368 = vmatprep.subr.mxu0 0.0
    %2369 = vmatpush2.msra.mxu0 0.0
    %2370 = vmatprep.subr.mxu0 0.0
    %2371 = vmatpush2.msra.mxu0 0.0
    %2372 = vmatprep.subr.mxu0 0.0
    %2373 = vmatpush2.msra.mxu0 0.0
    %2374 = vmatprep.subr.mxu0 0.0
    %2375 = vmatpush2.msra.mxu0 0.0
    %2376 = vmatprep.subr.mxu0 0.0
    %2377 = vmatpush2.msra.mxu0 0.0
    %2378 = vmatprep.subr.mxu0 0.0
    %2379 = vmatpush2.msra.mxu0 0.0
    %2380 = vmatprep.subr.mxu0 0.0
    %2381 = vmatpush2.msra.mxu0 0.0
    %2382 = vmatprep.subr.mxu0 0.0
    %2383 = vmatpush2.msra.mxu0 0.0
    %2384 = vmatprep.subr.mxu0 0.0
    %2385 = vmatpush2.msra.mxu0 0.0
    %2386 = vmatprep.subr.mxu0 0.0
    %2387 = vmatpush2.msra.mxu0 0.0
    %2388 = vmatprep.subr.mxu0 0.0
    %2389 = vmatpush2.msra.mxu0 0.0
    %2390 = vmatprep.subr.mxu0 0.0
    %2391 = vmatpush2.msra.mxu0 0.0
    %2392 = vmatprep.subr.mxu0 0.0
    %2393 = vmatpush2.msra.mxu0 0.0
    %2394 = vmatprep.subr.mxu0 0.0
    %2395 = vmatpush2.msra.mxu0 0.0
    %2396 = vmatprep.mubr.f32.mxu0 0.0
    %v2397 = vand.u32 %v1844, 4294901760
    %2398 = vmatmul.mubr.f32.gmra.mxu0 %v2397
    %v2399 = vpop.f32.mrf.mxu0
    %v2400 = vadd.f32 %v2281, %v2399
    %v2401 = vpop.f32.mrf.mxu0
    %2402 = vdwg.mxu0
    %2403 = vmatprep.subr.mxu0 0.0
    %v2404 = vand.u32 %v77, 4294901760
    %2405 = vmatpush1.msra.mxu0 %v2404
    %2406 = vmatprep.subr.mxu0 0.0
    %v2407 = vand.u32 %v76, 4294901760
    %2408 = vmatpush1.msra.mxu0 %v2407
    %2409 = vmatprep.subr.mxu0 0.0
    %v2410 = vand.u32 %v75, 4294901760
    %2411 = vmatpush1.msra.mxu0 %v2410
    %2412 = vmatprep.subr.mxu0 0.0
    %v2413 = vand.u32 %v74, 4294901760
    %2414 = vmatpush1.msra.mxu0 %v2413
    %2415 = vmatprep.subr.mxu0 0.0
    %v2416 = vand.u32 %v73, 4294901760
    %2417 = vmatpush1.msra.mxu0 %v2416
    %2418 = vmatprep.subr.mxu0 0.0
    %v2419 = vand.u32 %v72, 4294901760
    %2420 = vmatpush1.msra.mxu0 %v2419
    %2421 = vmatprep.subr.mxu0 0.0
    %v2422 = vand.u32 %v71, 4294901760
    %2423 = vmatpush1.msra.mxu0 %v2422
    %2424 = vmatprep.subr.mxu0 0.0
    %v2425 = vand.u32 %v70, 4294901760
    %2426 = vmatpush1.msra.mxu0 %v2425
    %2427 = vmatprep.subr.mxu0 0.0
    %v2428 = vand.u32 %v69, 4294901760
    %2429 = vmatpush1.msra.mxu0 %v2428
    %2430 = vmatprep.subr.mxu0 0.0
    %v2431 = vand.u32 %v68, 4294901760
    %2432 = vmatpush1.msra.mxu0 %v2431
    %2433 = vmatprep.subr.mxu0 0.0
    %v2434 = vand.u32 %v67, 4294901760
    %2435 = vmatpush1.msra.mxu0 %v2434
    %2436 = vmatprep.subr.mxu0 0.0
    %v2437 = vand.u32 %v66, 4294901760
    %2438 = vmatpush1.msra.mxu0 %v2437
    %2439 = vmatprep.subr.mxu0 0.0
    %v2440 = vand.u32 %v65, 4294901760
    %2441 = vmatpush1.msra.mxu0 %v2440
    %2442 = vmatprep.subr.mxu0 0.0
    %v2443 = vand.u32 %v64, 4294901760
    %2444 = vmatpush1.msra.mxu0 %v2443
    %2445 = vmatprep.subr.mxu0 0.0
    %v2446 = vand.u32 %v63, 4294901760
    %2447 = vmatpush1.msra.mxu0 %v2446
    %2448 = vmatprep.subr.mxu0 0.0
    %v2449 = vand.u32 %v62, 4294901760
    %2450 = vmatpush1.msra.mxu0 %v2449
    %2451 = vmatprep.subr.mxu0 0.0
    %2452 = vmatpush2.msra.mxu0 0.0
    %2453 = vmatprep.subr.mxu0 0.0
    %2454 = vmatpush2.msra.mxu0 0.0
    %2455 = vmatprep.subr.mxu0 0.0
    %2456 = vmatpush2.msra.mxu0 0.0
    %2457 = vmatprep.subr.mxu0 0.0
    %2458 = vmatpush2.msra.mxu0 0.0
    %2459 = vmatprep.subr.mxu0 0.0
    %2460 = vmatpush2.msra.mxu0 0.0
    %2461 = vmatprep.subr.mxu0 0.0
    %2462 = vmatpush2.msra.mxu0 0.0
    %2463 = vmatprep.subr.mxu0 0.0
    %2464 = vmatpush2.msra.mxu0 0.0
    %2465 = vmatprep.subr.mxu0 0.0
    %2466 = vmatpush2.msra.mxu0 0.0
    %2467 = vmatprep.subr.mxu0 0.0
    %2468 = vmatpush2.msra.mxu0 0.0
    %2469 = vmatprep.subr.mxu0 0.0
    %2470 = vmatpush2.msra.mxu0 0.0
    %2471 = vmatprep.subr.mxu0 0.0
    %2472 = vmatpush2.msra.mxu0 0.0
    %2473 = vmatprep.subr.mxu0 0.0
    %2474 = vmatpush2.msra.mxu0 0.0
    %2475 = vmatprep.subr.mxu0 0.0
    %2476 = vmatpush2.msra.mxu0 0.0
    %2477 = vmatprep.subr.mxu0 0.0
    %2478 = vmatpush2.msra.mxu0 0.0
    %2479 = vmatprep.subr.mxu0 0.0
    %2480 = vmatpush2.msra.mxu0 0.0
    %2481 = vmatprep.subr.mxu0 0.0
    %2482 = vmatpush2.msra.mxu0 0.0
    %2483 = vmatprep.mubr.f32.mxu0 0.0
    %v2484 = vand.u32 %v1844, 4294901760
    %2485 = vmatmul.mubr.f32.gmra.mxu0 %v2484
    %v2486 = vpop.f32.mrf.mxu0
    %v2487 = vadd.f32 %v2400, %v2486
    %v2488 = vpop.f32.mrf.mxu0
    %2489 = vdwg.mxu0
    %v2490 = vtanh.pop %v2487
    %v2491 = vlaneseq
    %v2492 = vshrl.u32 %v2491, 7
    %v2493 = vsub.s32 0, %v2492
    %v2494 = vrot.slane %v82, %v2493
    %v2495 = vmul.f32 %v2490, %v2494
    %v2496 = vlaneseq
    %v2497 = vshrl.u32 %v2496, 7
    %v2498 = vsub.s32 0, %v2497
    %v2499 = vrot.slane %v83, %v2498
    %v2500 = vadd.f32 %v2495, %v2499
    %2501 = vst [vmem:[%s3] sm:$0xff] %v2500
    // Predicated region
    $region18: #{ikmlp_scale_forward_pallas.1} parent=1 // pred_check
      _
    $region19: #{ikmlp_scale_forward_pallas.1} parent=1 // pred_check_branch
      %2503 = sbr.rel (0) target = $region21
    $region20: #{ikmlp_scale_forward_pallas.1} parent=1 // pred_region
      _
    $region21: #{ikmlp_scale_forward_pallas.1} parent=1 // pred_fallthru
      _
    // Predicated region
    $region22: #{ikmlp_scale_forward_pallas.1} parent=1 // pred_check
      _
    $region23: #{ikmlp_scale_forward_pallas.1} parent=1 // pred_check_branch
      %2505 = sbr.rel (0) target = $region25
    $region24: #{ikmlp_scale_forward_pallas.1} parent=1 // pred_region
      _
    $region25: #{ikmlp_scale_forward_pallas.1} parent=1 // pred_fallthru
      _
    %2506 = vsyncpa [#allocation3], 1

</llo_original>
